<compile_context>
chip_gen: v7x
topology: tpu7x:2x2x1
jax: 0.10.0
libtpu: 0.0.40
codegen_flags: <defaults>
</compile_context>

<pallas_src>
import functools

import jax
import jax.numpy as jnp
from jax import lax
from jax.experimental import pallas as pl
from jax.experimental.pallas import tpu as pltpu


# ----------------------------------------------------------------------------
# Kernel
# ----------------------------------------------------------------------------
def cru_kernel(x_ref, w_sq_ref, w_tap_ref, bias_ref, fold_ref, unfold_ref,
               o_ref, *, nb, H, WC, mm_dtype, softmax_approx):
    """One grid step = `nb` whole images, lane-dense (W folded into lanes).

    x_ref      : (nb*H, W*C)        input block (f32 or bf16)
    w_sq_ref   : (W*C, W*cqt)       kron(I_W, block-diag squeeze1+squeeze2)
    w_tap_ref  : (3, W*cqt, 2*W*C)  taps h-1 / h / h+1; cols = [Y1 pix | Y2 pix]
    bias_ref   : (1, 2*W*C)         [tile(b_gwc, W) | 0]
    fold_ref   : (2*W*C, 2C)        lane-fold: mean over the W pixel groups
    unfold_ref : (2C, 2*W*C)        lane-unfold: broadcast channel weights
    o_ref      : (nb*H, W*C)        output block (f32)
    """
    M = nb * H

    # ---- fused squeeze1 + squeeze2: one full-width (K = W*C) MXU matmul ----
    sq = jnp.dot(x_ref[...], w_sq_ref[...],
                 preferred_element_type=jnp.float32)          # (M, W*cqt) f32

    # ---- (3,1) grouped-conv taps via sublane roll + image-boundary mask ----
    # Rows are (image, h) with the H rows of each image contiguous in the
    # block, so the only rows where the roll wraps across an image (or block)
    # boundary are exactly the h==0 / h==H-1 rows, which the masks zero
    # (matching the conv's zero padding).  Keep this invariant if the block
    # shape ever changes.
    h_idx = lax.broadcasted_iota(jnp.int32, (M, 1), 0) % H    # (M, 1) predicate
    prev = jnp.where(h_idx > 0, pltpu.roll(sq, shift=1, axis=0), 0.0)
    nxt = jnp.where(h_idx < H - 1, pltpu.roll(sq, shift=M - 1, axis=0), 0.0)

    # ---- GWC + PWC1 + PWC2 + identity: three accumulating MXU pushes ----
    y12 = (bias_ref[...]
           + jnp.dot(prev.astype(mm_dtype), w_tap_ref[0],
                     preferred_element_type=jnp.float32)
           + jnp.dot(sq.astype(mm_dtype), w_tap_ref[1],
                     preferred_element_type=jnp.float32)
           + jnp.dot(nxt.astype(mm_dtype), w_tap_ref[2],
                     preferred_element_type=jnp.float32))     # (M, 2*W*C)

    # ---- per-image global-avg-pool + softmax over the 2C channels ----
    y3 = y12.reshape(nb, H, 2 * WC)                           # split rows: free (f32, 8-row groups)
    colavg = jnp.mean(y3, axis=1)                             # (nb, 2*W*C)
    avg = jnp.dot(colavg, fold_ref[...],
                  preferred_element_type=jnp.float32)         # (nb, 2C) per-channel GAP
    mx = jnp.max(avg, axis=-1, keepdims=True)
    e = jnp.exp(avg - mx)
    denom = jnp.sum(e, axis=-1, keepdims=True)
    if softmax_approx:
        wsm = e * pl.reciprocal(denom, approx=True)           # EUP slot
    else:
        wsm = e / denom                                       # exact (f32 path)
    wsm_f = jnp.dot(wsm, unfold_ref[...],
                    preferred_element_type=jnp.float32)       # (nb, 2*W*C)

    # ---- out = w1*Y1 + w2*Y2 ; halves are vreg-aligned 128-lane slices ----
    y3w = y3 * wsm_f[:, None, :]
    out = y3w[:, :, :WC] + y3w[:, :, WC:]                     # (nb, H, W*C)
    o_ref[...] = out.reshape(M, WC).astype(o_ref.dtype)


# ----------------------------------------------------------------------------
# Wrapper
# ----------------------------------------------------------------------------
def _pick_nb(N, nb_req):
    """Largest divisor of N that is <= nb_req (no silent fall to 1)."""
    nb_req = max(1, min(int(nb_req), N))
    for d in range(nb_req, 0, -1):
        if N % d == 0:
            return d
    return 1


def cru_forward(x, kparams, *, nb=None, mm_dtype=jnp.float32):
    """x: (N, H, W, C) float32 NHWC.  kparams: output of pack_cru_params."""
    N, H, W, C = x.shape
    WC = W * C
    w_sq_f, w_tap, bias_f, fold_m, unfold_m = kparams
    assert w_sq_f.shape[0] == WC and w_tap.shape[2] == 2 * WC, \
        "packed weights were built for a different (W, C)"

    # Default nb keeps >= 2 grid steps (v7x megacore / pipelining) while
    # maximizing block size; explicit nb is snapped to a divisor of N.
    nb = _pick_nb(N, N // 2 if nb is None else nb)

    x2 = x.reshape(N * H, WC)                     # free, contiguous relabel
    if mm_dtype == jnp.bfloat16:
        x2 = x2.astype(jnp.bfloat16)              # halve input HBM traffic

    cqt = w_sq_f.shape[1] // W
    flops = 2 * N * H * W * cqt * (C + 3 * 2 * C)     # squeeze + 3 taps (effective)
    flops += 2 * N * (2 * WC) * (2 * C) * 2           # fold + unfold
    bytes_accessed = int(x2.size) * x2.dtype.itemsize + N * H * WC * 4
    bytes_accessed += sum(int(a.size) * a.dtype.itemsize
                          for a in (w_sq_f, w_tap, bias_f, fold_m, unfold_m))
    cost = pl.CostEstimate(flops=int(flops),
                           transcendentals=int(N * 2 * C),
                           bytes_accessed=int(bytes_accessed))

    kern = functools.partial(cru_kernel, nb=nb, H=H, WC=WC, mm_dtype=mm_dtype,
                             softmax_approx=(mm_dtype == jnp.bfloat16))

    out = pl.pallas_call(
        kern,
        out_shape=jax.ShapeDtypeStruct((N * H, WC), jnp.float32),
        grid=(N // nb,),
        in_specs=[
            pl.BlockSpec((nb * H, WC), lambda i: (i, 0)),
            pl.BlockSpec(w_sq_f.shape, lambda i: (0, 0)),
            pl.BlockSpec(w_tap.shape, lambda i: (0, 0, 0)),
            pl.BlockSpec(bias_f.shape, lambda i: (0, 0)),
            pl.BlockSpec(fold_m.shape, lambda i: (0, 0)),
            pl.BlockSpec(unfold_m.shape, lambda i: (0, 0)),
        ],
        out_specs=pl.BlockSpec((nb * H, WC), lambda i: (i, 0)),
        compiler_params=pltpu.CompilerParams(
            dimension_semantics=("parallel",),
            vmem_limit_bytes=32 * 1024 * 1024),
        cost_estimate=cost,
    )(x2, w_sq_f, w_tap, bias_f, fold_m, unfold_m)

    return out.reshape(N, H, W, C)


# ----------------------------------------------------------------------------
# Weight packing glue (plain JAX, runs once)
# ----------------------------------------------------------------------------
def pack_cru_params(raw, groups, W, mm_dtype):
    """PyTorch-layout params -> fused, W-folded (lane-dense) kernel weights."""
    w_sq1, w_sq2, w_gwc, b_gwc, w_pwc1, w_pwc2 = raw
    C = w_gwc.shape[0]
    up_c, low_c = w_sq1.shape[1], w_sq2.shape[1]
    cq1, cq2 = w_sq1.shape[0], w_sq2.shape[0]
    cqt = cq1 + cq2
    gks = w_gwc.shape[2]
    assert gks == 3, "kernel is specialized for group_kernel_size == 3"
    out_g, in_g = C // groups, cq1 // groups

    # per-pixel fused squeeze: block-diagonal (C, cqt)
    w_sq = jnp.zeros((C, cqt), jnp.float32)
    w_sq = w_sq.at[:up_c, :cq1].set(w_sq1[:, :, 0, 0].T)
    w_sq = w_sq.at[up_c:, cq1:].set(w_sq2[:, :, 0, 0].T)

    # per-tap per-pixel weights (cqt, 2C) with cols = [Y1 | Y2]
    taps = []
    for k in range(gks):
        t = jnp.zeros((cqt, 2 * C), jnp.float32)
        for g in range(groups):
            blk = w_gwc[g * out_g:(g + 1) * out_g, :, k, 0].T   # (in_g, out_g)
            t = t.at[g * in_g:(g + 1) * in_g,
                     g * out_g:(g + 1) * out_g].set(blk)
        taps.append(t)
    # center tap also carries PWC1 (Y1) and PWC2 + identity (Y2 = [PWC2(low_s)|low_s])
    taps[1] = taps[1].at[:cq1, :C].add(w_pwc1[:, :, 0, 0].T)
    w_pwc2_full = jnp.concatenate(
        [w_pwc2[:, :, 0, 0].T, jnp.eye(cq2, dtype=jnp.float32)], axis=1)
    taps[1] = taps[1].at[cq1:, C:].set(w_pwc2_full)

    # ---- fold W into the lane dim (Kronecker expansion) ----
    eyeW = jnp.eye(W, dtype=jnp.float32)
    w_sq_f = jnp.kron(eyeW, w_sq)                               # (W*C, W*cqt)
    tap_f = []
    for t in taps:
        a = jnp.kron(eyeW, t[:, :C])                            # Y1 half (W*cqt, W*C)
        b = jnp.kron(eyeW, t[:, C:])                            # Y2 half (W*cqt, W*C)
        tap_f.append(jnp.concatenate([a, b], axis=1))           # (W*cqt, 2*W*C)
    w_tap = jnp.stack(tap_f, axis=0)                            # (3, W*cqt, 2*W*C)

    bias_f = jnp.concatenate(
        [jnp.tile(b_gwc, W), jnp.zeros((W * C,), jnp.float32)]).reshape(1, 2 * W * C)

    # fold: per-channel mean over the W pixel groups; unfold: its 0/1 transpose
    fold_half = jnp.kron(jnp.ones((W, 1), jnp.float32) / W,
                         jnp.eye(C, dtype=jnp.float32))          # (W*C, C)
    fold_m = jnp.zeros((2 * W * C, 2 * C), jnp.float32)
    fold_m = fold_m.at[:W * C, :C].set(fold_half)
    fold_m = fold_m.at[W * C:, C:].set(fold_half)
    unfold_m = (fold_m * W).T                                    # (2C, 2*W*C)

    return (w_sq_f.astype(mm_dtype), w_tap.astype(mm_dtype),
            bias_f, fold_m, unfold_m)


# ----------------------------------------------------------------------------
# Pure-JAX reference (replicates the PyTorch CRU forward, NHWC)
# ----------------------------------------------------------------------------
def cru_reference(x, raw, groups):
    w_sq1, w_sq2, w_gwc, b_gwc, w_pwc1, w_pwc2 = raw
    up_c = w_sq1.shape[1]
    up, low = x[..., :up_c], x[..., up_c:]
    up_s = jnp.einsum('nhwc,dc->nhwd', up, w_sq1[:, :, 0, 0])
    low_s = jnp.einsum('nhwc,dc->nhwd', low, w_sq2[:, :, 0, 0])
    rhs = jnp.transpose(w_gwc, (2, 3, 1, 0))                      # HWIO
    gwc = lax.conv_general_dilated(
        up_s, rhs, window_strides=(1, 1), padding=((1, 1), (0, 0)),
        dimension_numbers=('NHWC', 'HWIO', 'NHWC'),
        feature_group_count=groups) + b_gwc
    y1 = gwc + jnp.einsum('nhwc,dc->nhwd', up_s, w_pwc1[:, :, 0, 0])
    y2 = jnp.concatenate(
        [jnp.einsum('nhwc,dc->nhwd', low_s, w_pwc2[:, :, 0, 0]), low_s], -1)
    out = jnp.concatenate([y1, y2], -1)
    avg = jnp.mean(out, axis=(1, 2), keepdims=True)
    w = jax.nn.softmax(avg, axis=-1)
    out = out * w
    Cc = y1.shape[-1]
    return out[..., :Cc] + out[..., Cc:]


# ----------------------------------------------------------------------------
# Test
# ----------------------------------------------------------------------------
if __name__ == "__main__":
    # CRU(op_channel=16, alpha=0.5, squeeze_radio=2, group_size=2,
    #     group_kernel_size=3)
    N, H, W, C = 8, 8, 8, 16
    alpha, sqz, groups, gks = 0.5, 2, 2, 3
    up_c = int(alpha * C)            # 8
    low_c = C - up_c                 # 8
    cq1 = up_c // sqz                # 4
    cq2 = low_c // sqz               # 4
    in_g = cq1 // groups             # 2

    key = jax.random.PRNGKey(0)
    ks = jax.random.split(key, 7)
    x = jax.random.normal(ks[0], (N, H, W, C), jnp.float32)

    # PyTorch-layout parameters (out, in, kh, kw), deterministic init.
    w_sq1 = 0.1 * jax.random.normal(ks[1], (cq1, up_c, 1, 1), jnp.float32)
    w_sq2 = 0.1 * jax.random.normal(ks[2], (cq2, low_c, 1, 1), jnp.float32)
    w_gwc = 0.1 * jax.random.normal(ks[3], (C, in_g, gks, 1), jnp.float32)
    b_gwc = 0.1 * jax.random.normal(ks[4], (C,), jnp.float32)
    w_pwc1 = 0.1 * jax.random.normal(ks[5], (C, cq1, 1, 1), jnp.float32)
    w_pwc2 = 0.1 * jax.random.normal(ks[6], (C - cq2, cq2, 1, 1), jnp.float32)
    raw = (w_sq1, w_sq2, w_gwc, b_gwc, w_pwc1, w_pwc2)

    ref = cru_reference(x, raw, groups)

    # f32 MXU path — tight tolerance (auto nb -> nb=4, grid=2).
    kp32 = pack_cru_params(raw, groups, W, jnp.float32)
    out32 = jax.block_until_ready(cru_forward(x, kp32, mm_dtype=jnp.float32))
    assert out32.shape == (N, H, W, C)
    err32 = float(jnp.max(jnp.abs(out32 - ref)))
    assert err32 < 1e-4, f"f32 mismatch vs reference: {err32}"

    # bf16 HBM feed + bf16 MXU operands, f32 accumulation — looser tolerance.
    kp16 = pack_cru_params(raw, groups, W, jnp.bfloat16)
    out16 = jax.block_until_ready(cru_forward(x, kp16, nb=2,
                                              mm_dtype=jnp.bfloat16))
    err16 = float(jnp.max(jnp.abs(out16 - ref)))
    assert err16 < 1e-2, f"bf16 mismatch vs reference: {err16}"

    print("KERNEL_OK")
</pallas_src>

<mosaic_0001>
module attributes {stable_mosaic.version = 11 : i64} {
  func.func @cru_kernel(%arg0: i32, %arg1: memref<32x128xf32, #tpu.memory_space<vmem>>, %arg2: memref<128x64xf32, #tpu.memory_space<vmem>>, %arg3: memref<3x64x256xf32, #tpu.memory_space<vmem>>, %arg4: memref<1x256xf32, #tpu.memory_space<vmem>>, %arg5: memref<256x32xf32, #tpu.memory_space<vmem>>, %arg6: memref<32x256xf32, #tpu.memory_space<vmem>>, %arg7: memref<32x128xf32, #tpu.memory_space<vmem>>) attributes {dimension_semantics = [#tpu.dimension_semantics<parallel>], iteration_bounds = array<i64: 2>, scalar_prefetch = 0 : i64, scratch_operands = 0 : i64, tpu.core_type = #tpu.core_type<tc>, window_params = [{transform_indices = @transform_0, window_bounds = array<i64: 32, 128>}, {pipeline_mode = #tpu.pipeline_mode<synchronous>, transform_indices = @transform_1, window_bounds = array<i64: 128, 64>}, {pipeline_mode = #tpu.pipeline_mode<synchronous>, transform_indices = @transform_2, window_bounds = array<i64: 3, 64, 256>}, {pipeline_mode = #tpu.pipeline_mode<synchronous>, transform_indices = @transform_3, window_bounds = array<i64: 1, 256>}, {pipeline_mode = #tpu.pipeline_mode<synchronous>, transform_indices = @transform_4, window_bounds = array<i64: 256, 32>}, {pipeline_mode = #tpu.pipeline_mode<synchronous>, transform_indices = @transform_5, window_bounds = array<i64: 32, 256>}, {transform_indices = @transform_6, window_bounds = array<i64: 32, 128>}]} {
    %c0 = arith.constant 0 : index
    %c0_0 = arith.constant 0 : index
    %0 = vector.load %arg1[%c0, %c0_0] : memref<32x128xf32, #tpu.memory_space<vmem>>, vector<32x128xf32>
    %c0_1 = arith.constant 0 : index
    %c0_2 = arith.constant 0 : index
    %1 = vector.load %arg2[%c0_1, %c0_2] : memref<128x64xf32, #tpu.memory_space<vmem>>, vector<128x64xf32>
    %cst = arith.constant dense<0.000000e+00> : vector<32x64xf32>
    %2 = tpu.matmul %0, %1, %cst {dimension_numbers = #tpu.dot_dimension_numbers<[1], [0], [0], [1], [0, 0, 1, 1], [], []>} : vector<32x128xf32>, vector<128x64xf32>, vector<32x64xf32> -> vector<32x64xf32>
    %3 = tpu.iota {dimensions = array<i32: 0>} : vector<32x1xi32>
    %c8_i32 = arith.constant 8 : i32
    %c0_i32 = arith.constant 0 : i32
    %4 = arith.cmpi eq, %c8_i32, %c0_i32 : i32
    %c1_i32 = arith.constant 1 : i32
    %5 = arith.select %4, %c1_i32, %c8_i32 : i32
    %6 = vector.broadcast %5 : i32 to vector<32x1xi32>
    %7 = arith.remsi %3, %6 : vector<32x1xi32>
    %c0_i32_3 = arith.constant 0 : i32
    %8 = vector.broadcast %c0_i32_3 : i32 to vector<32x1xi32>
    %9 = arith.cmpi ne, %7, %8 : vector<32x1xi32>
    %c0_i32_4 = arith.constant 0 : i32
    %10 = vector.broadcast %c0_i32_4 : i32 to vector<32x1xi32>
    %11 = arith.cmpi slt, %7, %10 : vector<32x1xi32>
    %c0_i32_5 = arith.constant 0 : i32
    %12 = arith.cmpi slt, %5, %c0_i32_5 : i32
    %13 = vector.broadcast %12 : i1 to vector<32x1xi1>
    %14 = vector.broadcast %13 : vector<32x1xi1> to vector<32x1xi1>
    %15 = arith.xori %11, %14 : vector<32x1xi1>
    %16 = arith.andi %15, %9 : vector<32x1xi1>
    %17 = vector.broadcast %5 : i32 to vector<32x1xi32>
    %18 = arith.addi %7, %17 : vector<32x1xi32>
    %19 = arith.select %16, %18, %7 : vector<32x1xi1>, vector<32x1xi32>
    %c0_i32_6 = arith.constant 0 : i32
    %20 = vector.broadcast %c0_i32_6 : i32 to vector<32x1xi32>
    %21 = arith.cmpi sgt, %19, %20 : vector<32x1xi32>
    %c1_i32_7 = arith.constant 1 : i32
    %22 = tpu.dynamic_rotate %2 by %c1_i32_7 dim 0 : vector<32x64xf32>, i32 -> vector<32x64xf32>
    %cst_8 = arith.constant 0.000000e+00 : f32
    %23 = vector.shape_cast %21 : vector<32x1xi1> to vector<32x1xi1>
    %24 = vector.broadcast %23 : vector<32x1xi1> to vector<32x64xi1>
    %25 = vector.broadcast %cst_8 : f32 to vector<32x64xf32>
    %26 = arith.select %24, %22, %25 : vector<32x64xi1>, vector<32x64xf32>
    %c7_i32 = arith.constant 7 : i32
    %27 = vector.broadcast %c7_i32 : i32 to vector<32x1xi32>
    %28 = arith.cmpi slt, %19, %27 : vector<32x1xi32>
    %c31_i32 = arith.constant 31 : i32
    %29 = tpu.dynamic_rotate %2 by %c31_i32 dim 0 : vector<32x64xf32>, i32 -> vector<32x64xf32>
    %cst_9 = arith.constant 0.000000e+00 : f32
    %30 = vector.shape_cast %28 : vector<32x1xi1> to vector<32x1xi1>
    %31 = vector.broadcast %30 : vector<32x1xi1> to vector<32x64xi1>
    %32 = vector.broadcast %cst_9 : f32 to vector<32x64xf32>
    %33 = arith.select %31, %29, %32 : vector<32x64xi1>, vector<32x64xf32>
    %c0_10 = arith.constant 0 : index
    %c0_11 = arith.constant 0 : index
    %34 = vector.load %arg4[%c0_10, %c0_11] : memref<1x256xf32, #tpu.memory_space<vmem>>, vector<1x256xf32>
    %c0_12 = arith.constant 0 : index
    %c0_13 = arith.constant 0 : index
    %c0_14 = arith.constant 0 : index
    %35 = vector.load %arg3[%c0_12, %c0_13, %c0_14] : memref<3x64x256xf32, #tpu.memory_space<vmem>>, vector<1x64x256xf32>
    %36 = vector.shape_cast %35 : vector<1x64x256xf32> to vector<64x256xf32>
    %cst_15 = arith.constant dense<0.000000e+00> : vector<32x256xf32>
    %37 = tpu.matmul %26, %36, %cst_15 {dimension_numbers = #tpu.dot_dimension_numbers<[1], [0], [0], [1], [0, 0, 1, 1], [], []>} : vector<32x64xf32>, vector<64x256xf32>, vector<32x256xf32> -> vector<32x256xf32>
    %38 = vector.broadcast %34 : vector<1x256xf32> to vector<32x256xf32>
    %39 = arith.addf %38, %37 : vector<32x256xf32>
    %c1 = arith.constant 1 : index
    %c0_16 = arith.constant 0 : index
    %c0_17 = arith.constant 0 : index
    %40 = vector.load %arg3[%c1, %c0_16, %c0_17] : memref<3x64x256xf32, #tpu.memory_space<vmem>>, vector<1x64x256xf32>
    %41 = vector.shape_cast %40 : vector<1x64x256xf32> to vector<64x256xf32>
    %cst_18 = arith.constant dense<0.000000e+00> : vector<32x256xf32>
    %42 = tpu.matmul %2, %41, %cst_18 {dimension_numbers = #tpu.dot_dimension_numbers<[1], [0], [0], [1], [0, 0, 1, 1], [], []>} : vector<32x64xf32>, vector<64x256xf32>, vector<32x256xf32> -> vector<32x256xf32>
    %43 = arith.addf %39, %42 : vector<32x256xf32>
    %c2 = arith.constant 2 : index
    %c0_19 = arith.constant 0 : index
    %c0_20 = arith.constant 0 : index
    %44 = vector.load %arg3[%c2, %c0_19, %c0_20] : memref<3x64x256xf32, #tpu.memory_space<vmem>>, vector<1x64x256xf32>
    %45 = vector.shape_cast %44 : vector<1x64x256xf32> to vector<64x256xf32>
    %cst_21 = arith.constant dense<0.000000e+00> : vector<32x256xf32>
    %46 = tpu.matmul %33, %45, %cst_21 {dimension_numbers = #tpu.dot_dimension_numbers<[1], [0], [0], [1], [0, 0, 1, 1], [], []>} : vector<32x64xf32>, vector<64x256xf32>, vector<32x256xf32> -> vector<32x256xf32>
    %47 = arith.addf %43, %46 : vector<32x256xf32>
    %48 = vector.shape_cast %47 : vector<32x256xf32> to vector<4x8x256xf32>
    %cst_22 = arith.constant dense<0.000000e+00> : vector<4x256xf32>
    %49 = vector.multi_reduction <add>, %48, %cst_22 [1] : vector<4x8x256xf32> to vector<4x256xf32>
    %cst_23 = arith.constant 8.000000e+00 : f32
    %50 = vector.broadcast %cst_23 : f32 to vector<4x256xf32>
    %51 = arith.divf %49, %50 : vector<4x256xf32>
    %c0_24 = arith.constant 0 : index
    %c0_25 = arith.constant 0 : index
    %52 = vector.load %arg5[%c0_24, %c0_25] : memref<256x32xf32, #tpu.memory_space<vmem>>, vector<256x32xf32>
    %cst_26 = arith.constant dense<0.000000e+00> : vector<4x32xf32>
    %53 = tpu.matmul %51, %52, %cst_26 {dimension_numbers = #tpu.dot_dimension_numbers<[1], [0], [0], [1], [0, 0, 1, 1], [], []>} : vector<4x256xf32>, vector<256x32xf32>, vector<4x32xf32> -> vector<4x32xf32>
    %cst_27 = arith.constant dense<0xFF800000> : vector<4xf32>
    %54 = vector.multi_reduction <maximumf>, %53, %cst_27 [1] : vector<4x32xf32> to vector<4xf32>
    %55 = vector.shape_cast %54 : vector<4xf32> to vector<4x1xf32>
    %56 = vector.broadcast %55 : vector<4x1xf32> to vector<4x32xf32>
    %57 = arith.subf %53, %56 : vector<4x32xf32>
    %58 = math.exp %57 : vector<4x32xf32>
    %cst_28 = arith.constant dense<0.000000e+00> : vector<4xf32>
    %59 = vector.multi_reduction <add>, %58, %cst_28 [1] : vector<4x32xf32> to vector<4xf32>
    %60 = vector.shape_cast %59 : vector<4xf32> to vector<4x1xf32>
    %61 = vector.broadcast %60 : vector<4x1xf32> to vector<4x32xf32>
    %62 = arith.divf %58, %61 : vector<4x32xf32>
    %c0_29 = arith.constant 0 : index
    %c0_30 = arith.constant 0 : index
    %63 = vector.load %arg6[%c0_29, %c0_30] : memref<32x256xf32, #tpu.memory_space<vmem>>, vector<32x256xf32>
    %cst_31 = arith.constant dense<0.000000e+00> : vector<4x256xf32>
    %64 = tpu.matmul %62, %63, %cst_31 {dimension_numbers = #tpu.dot_dimension_numbers<[1], [0], [0], [1], [0, 0, 1, 1], [], []>} : vector<4x32xf32>, vector<32x256xf32>, vector<4x256xf32> -> vector<4x256xf32>
    %65 = vector.shape_cast %64 : vector<4x256xf32> to vector<4x1x256xf32>
    %66 = vector.broadcast %65 : vector<4x1x256xf32> to vector<4x8x256xf32>
    %67 = arith.mulf %48, %66 : vector<4x8x256xf32>
    %68 = vector.extract_strided_slice %67 {offsets = [0, 0, 0], sizes = [4, 8, 128], strides = [1, 1, 1]} : vector<4x8x256xf32> to vector<4x8x128xf32>
    %69 = vector.extract_strided_slice %67 {offsets = [0, 0, 128], sizes = [4, 8, 128], strides = [1, 1, 1]} : vector<4x8x256xf32> to vector<4x8x128xf32>
    %70 = arith.addf %68, %69 : vector<4x8x128xf32>
    %71 = vector.shape_cast %70 : vector<4x8x128xf32> to vector<32x128xf32>
    %c0_32 = arith.constant 0 : index
    %c0_33 = arith.constant 0 : index
    %72 = vector.load %arg7[%c0_32, %c0_33] : memref<32x128xf32, #tpu.memory_space<vmem>>, vector<32x128xf32>
    tpu.vector_store %arg7[%c0_32, %c0_33], %71 {strides = array<i32>} : memref<32x128xf32, #tpu.memory_space<vmem>>, vector<32x128xf32>,
    return
  }
  func.func @transform_0(%arg0: i32) -> (i32, i32) {
    %c0_i32 = arith.constant 0 : i32
    %c0_i32_0 = arith.constant 0 : i32
    return %arg0, %c0_i32 : i32, i32
  }
  func.func @transform_1(%arg0: i32) -> (i32, i32) {
    %c0_i32 = arith.constant 0 : i32
    %c0_i32_0 = arith.constant 0 : i32
    %c0_i32_1 = arith.constant 0 : i32
    return %c0_i32, %c0_i32_0 : i32, i32
  }
  func.func @transform_2(%arg0: i32) -> (i32, i32, i32) {
    %c0_i32 = arith.constant 0 : i32
    %c0_i32_0 = arith.constant 0 : i32
    %c0_i32_1 = arith.constant 0 : i32
    %c0_i32_2 = arith.constant 0 : i32
    return %c0_i32, %c0_i32_0, %c0_i32_1 : i32, i32, i32
  }
  func.func @transform_3(%arg0: i32) -> (i32, i32) {
    %c0_i32 = arith.constant 0 : i32
    %c0_i32_0 = arith.constant 0 : i32
    %c0_i32_1 = arith.constant 0 : i32
    return %c0_i32, %c0_i32_0 : i32, i32
  }
  func.func @transform_4(%arg0: i32) -> (i32, i32) {
    %c0_i32 = arith.constant 0 : i32
    %c0_i32_0 = arith.constant 0 : i32
    %c0_i32_1 = arith.constant 0 : i32
    return %c0_i32, %c0_i32_0 : i32, i32
  }
  func.func @transform_5(%arg0: i32) -> (i32, i32) {
    %c0_i32 = arith.constant 0 : i32
    %c0_i32_0 = arith.constant 0 : i32
    %c0_i32_1 = arith.constant 0 : i32
    return %c0_i32, %c0_i32_0 : i32, i32
  }
  func.func @transform_6(%arg0: i32) -> (i32, i32) {
    %c0_i32 = arith.constant 0 : i32
    %c0_i32_0 = arith.constant 0 : i32
    return %arg0, %c0_i32 : i32, i32
  }
}

</mosaic_0001>

<llo_original>
// kernel: tpu_custom_call.1
$region0: #{tpu_custom_call.1}
  #allocation0 [shape = 'u32[]', space=smem, size = 0x4, offset = 0x4, fixed_abs, tag = 'smem constant byte address 0x4 - core index']
  #allocation1 [shape = 'u32[144,128]{1,0:T(1,128)}', space=vmem, size = 0x12000, scoped, tag = 'internal scratch']
  %s0 = inlined_call_operand.vmem [shape: f32[64,128], index: 0, kind: input, shape index: {}]
  %s1 = inlined_call_operand.vmem [shape: f32[128,64], index: 1, kind: input, shape index: {}]
  %s2 = inlined_call_operand.vmem [shape: f32[3,64,256], index: 2, kind: input, shape index: {}]
  %s3 = inlined_call_operand.vmem [shape: f32[1,256], index: 3, kind: input, shape index: {}]
  %s4 = inlined_call_operand.vmem [shape: f32[256,32], index: 4, kind: input, shape index: {}]
  %s5 = inlined_call_operand.hbm [shape: f32[32,256], index: 5, kind: input, shape index: {}]
  %s6 = inlined_call_operand.hbm [shape: f32[64,128], index: 6, kind: output, shape index: {}]
  %s7 = sld [smem:[#allocation0]]
  $region61: #{tpu_custom_call.1} parent=0
    _
  %s9 = ssub.s32 1, %s7
  %s10 = scalar_select 0, %s9, %s7
  $region1: #{tpu_custom_call.1} parent=0
    #allocation2 [shape = 'u8[32768]{0}', space=vmem, size = 0x8000, scoped, tag = 'input window, operand 5, single buffered']
    #allocation3 [shape = 's32[2]{0}', space=sflag, size = 0x8, scoped, tag = 'scoped memory for tpu_custom_call.1']
    #allocation4 [shape = 's32[2]{0}', space=sflag, size = 0x8, scoped, tag = 'scoped memory for tpu_custom_call.1']
    #allocation5 [shape = 'u8[32768]{0}', space=vmem, size = 0x8000, scoped, tag = 'output window, operand 0']
    %11 = vsyncpa [#allocation3], 0
    %12 = vsyncpa [#allocation4], 0
    %s13 = scalar_lea.sflag [#allocation4], 1
    %14 = vsyncpa %s13, 0
    loop: start=0, step=1, limit=4
    $region2: #{tpu_custom_call.1} parent=1 // loop_pre_header
      _
    $region3: #{tpu_custom_call.1} parent=1 // loop_header
      %s16 = sphi 0, %s20
      %p17 = scmp.ge.s32.totalorder %s16, 4
      %s26 = sphi 0, %s28
      %s29 = sphi 0, %s26
      %s30 = sphi 0, %s29
      %s46 = sphi 0, %s30
      %s50 = sphi 0, %s50
      %s52 = sphi 0, %s50
      %s53 = sphi 0, %s52
      %s67 = sphi 0, %s53
      %s71 = sphi 0, %s71
      %s73 = sphi 0, %s71
      %s74 = sphi 0, %s73
      %s88 = sphi 0, %s74
      %s92 = sphi 0, %s92
      %s94 = sphi 0, %s92
      %s95 = sphi 0, %s94
      %s109 = sphi 0, %s95
      %s113 = sphi 0, %s113
      %s115 = sphi 0, %s113
      %s116 = sphi 0, %s115
      %s130 = sphi 0, %s116
      %s134 = sphi 0, %s134
      %s136 = sphi 0, %s134
      %s137 = sphi 0, %s136
      %s151 = sphi 0, %s137
      %s157 = sphi 0, %s159
      %s160 = sphi 0, %s157
      %s161 = sphi 0, %s160
      %s177 = sphi 0, %s161
    $region4: #{tpu_custom_call.1} parent=1 // loop_header_branch
      %19 = sbr.rel (%p17) target = $region8
    $region5: #{tpu_custom_call.1} parent=1 // loop_body
      %s21 = ssub.s32 %s16, 1
      %s22 = ssub.s32 %s16, 2
      %s23 = sadd.s32 %s16, 1
      %s24 = ssub.s32 %s16, %s23
      %p25 = scmp.eq.s32.totalorder %s24, 0
      %s27 = sadd.s32 %s26, 1
      %s28 = scalar_select %p25, %s26, %s27
      %p31 = pneg %p25
      %p32 = scmp.eq.s32.totalorder %s16, 1
      %p33 = por %p31, %p32
      %p34 = scmp.ne.s32.totalorder %s26, %s29
      %p35 = scmp.eq.s32.totalorder %s16, 0
      %p36 = por %p34, %p35
      %p37 = scmp.ne.s32.totalorder %s26, %s29
      %p38 = scmp.eq.s32.totalorder %s21, 1
      %p39 = por %p37, %p38
      %p40 = scmp.ne.s32.totalorder %s29, %s30
      %p41 = scmp.eq.s32.totalorder %s21, 0
      %p42 = por %p40, %p41
      %p43 = scmp.ne.s32.totalorder %s29, %s30
      %p44 = scmp.eq.s32.totalorder %s22, 1
      %p45 = por %p43, %p44
      %p47 = scmp.ne.s32.totalorder %s30, %s46
      %p48 = scmp.eq.s32.totalorder %s22, 0
      %p49 = por %p47, %p48
      %s51 = sadd.s32 %s50, 1
      %p54 = scmp.eq.s32.totalorder %s16, 1
      %p55 = scmp.ne.s32.totalorder %s50, %s52
      %p56 = scmp.eq.s32.totalorder %s16, 0
      %p57 = por %p55, %p56
      %p58 = scmp.ne.s32.totalorder %s50, %s52
      %p59 = scmp.eq.s32.totalorder %s21, 1
      %p60 = por %p58, %p59
      %p61 = scmp.ne.s32.totalorder %s52, %s53
      %p62 = scmp.eq.s32.totalorder %s21, 0
      %p63 = por %p61, %p62
      %p64 = scmp.ne.s32.totalorder %s52, %s53
      %p65 = scmp.eq.s32.totalorder %s22, 1
      %p66 = por %p64, %p65
      %p68 = scmp.ne.s32.totalorder %s53, %s67
      %p69 = scmp.eq.s32.totalorder %s22, 0
      %p70 = por %p68, %p69
      %s72 = sadd.s32 %s71, 1
      %p75 = scmp.eq.s32.totalorder %s16, 1
      %p76 = scmp.ne.s32.totalorder %s71, %s73
      %p77 = scmp.eq.s32.totalorder %s16, 0
      %p78 = por %p76, %p77
      %p79 = scmp.ne.s32.totalorder %s71, %s73
      %p80 = scmp.eq.s32.totalorder %s21, 1
      %p81 = por %p79, %p80
      %p82 = scmp.ne.s32.totalorder %s73, %s74
      %p83 = scmp.eq.s32.totalorder %s21, 0
      %p84 = por %p82, %p83
      %p85 = scmp.ne.s32.totalorder %s73, %s74
      %p86 = scmp.eq.s32.totalorder %s22, 1
      %p87 = por %p85, %p86
      %p89 = scmp.ne.s32.totalorder %s74, %s88
      %p90 = scmp.eq.s32.totalorder %s22, 0
      %p91 = por %p89, %p90
      %s93 = sadd.s32 %s92, 1
      %p96 = scmp.eq.s32.totalorder %s16, 1
      %p97 = scmp.ne.s32.totalorder %s92, %s94
      %p98 = scmp.eq.s32.totalorder %s16, 0
      %p99 = por %p97, %p98
      %p100 = scmp.ne.s32.totalorder %s92, %s94
      %p101 = scmp.eq.s32.totalorder %s21, 1
      %p102 = por %p100, %p101
      %p103 = scmp.ne.s32.totalorder %s94, %s95
      %p104 = scmp.eq.s32.totalorder %s21, 0
      %p105 = por %p103, %p104
      %p106 = scmp.ne.s32.totalorder %s94, %s95
      %p107 = scmp.eq.s32.totalorder %s22, 1
      %p108 = por %p106, %p107
      %p110 = scmp.ne.s32.totalorder %s95, %s109
      %p111 = scmp.eq.s32.totalorder %s22, 0
      %p112 = por %p110, %p111
      %s114 = sadd.s32 %s113, 1
      %p117 = scmp.eq.s32.totalorder %s16, 1
      %p118 = scmp.ne.s32.totalorder %s113, %s115
      %p119 = scmp.eq.s32.totalorder %s16, 0
      %p120 = por %p118, %p119
      %p121 = scmp.ne.s32.totalorder %s113, %s115
      %p122 = scmp.eq.s32.totalorder %s21, 1
      %p123 = por %p121, %p122
      %p124 = scmp.ne.s32.totalorder %s115, %s116
      %p125 = scmp.eq.s32.totalorder %s21, 0
      %p126 = por %p124, %p125
      %p127 = scmp.ne.s32.totalorder %s115, %s116
      %p128 = scmp.eq.s32.totalorder %s22, 1
      %p129 = por %p127, %p128
      %p131 = scmp.ne.s32.totalorder %s116, %s130
      %p132 = scmp.eq.s32.totalorder %s22, 0
      %p133 = por %p131, %p132
      %s135 = sadd.s32 %s134, 1
      %p138 = scmp.eq.s32.totalorder %s16, 1
      %p139 = scmp.ne.s32.totalorder %s134, %s136
      %p140 = scmp.eq.s32.totalorder %s16, 0
      %p141 = por %p139, %p140
      %p142 = scmp.ne.s32.totalorder %s134, %s136
      %p143 = scmp.eq.s32.totalorder %s21, 1
      %p144 = por %p142, %p143
      %p145 = scmp.ne.s32.totalorder %s136, %s137
      %p146 = scmp.eq.s32.totalorder %s21, 0
      %p147 = por %p145, %p146
      %p148 = scmp.ne.s32.totalorder %s136, %s137
      %p149 = scmp.eq.s32.totalorder %s22, 1
      %p150 = por %p148, %p149
      %p152 = scmp.ne.s32.totalorder %s137, %s151
      %p153 = scmp.eq.s32.totalorder %s22, 0
      %p154 = por %p152, %p153
      %s155 = ssub.s32 %s16, %s23
      %p156 = scmp.eq.s32.totalorder %s155, 0
      %s158 = sadd.s32 %s157, 1
      %s159 = scalar_select %p156, %s157, %s158
      %p162 = pneg %p156
      %p163 = scmp.eq.s32.totalorder %s16, 1
      %p164 = por %p162, %p163
      %p165 = scmp.ne.s32.totalorder %s157, %s160
      %p166 = scmp.eq.s32.totalorder %s16, 0
      %p167 = por %p165, %p166
      %p168 = scmp.ne.s32.totalorder %s157, %s160
      %p169 = scmp.eq.s32.totalorder %s21, 1
      %p170 = por %p168, %p169
      %p171 = scmp.ne.s32.totalorder %s160, %s161
      %p172 = scmp.eq.s32.totalorder %s21, 0
      %p173 = por %p171, %p172
      %p174 = scmp.ne.s32.totalorder %s160, %s161
      %p175 = scmp.eq.s32.totalorder %s22, 1
      %p176 = por %p174, %p175
      %p178 = scmp.ne.s32.totalorder %s161, %s177
      %p179 = scmp.eq.s32.totalorder %s22, 0
      %p180 = por %p178, %p179
      %p181 = scmp.le.s32.totalorder 1, %s16
      %p182 = scmp.lt.s32.totalorder %s16, 3
      %p183 = pnand %p181, %p182
      %p184 = pneg %p183
      // Predicated region
      $region9: #{tpu_custom_call.1} parent=5 // pred_check
        _
      $region10: #{tpu_custom_call.1} parent=5 // pred_check_branch
        %186 = sbr.rel (%p183) target = $region12
      $region11: #{tpu_custom_call.1} parent=5 // pred_region
        %s187 = ssub.s32 %s16, 1
        // Predicated region
        $region13: #{tpu_custom_call.1} parent=11 // pred_check
          %p188 = pneg %p63
        $region14: #{tpu_custom_call.1} parent=11 // pred_check_branch
          %190 = sbr.rel (%p188) target = $region16
        $region15: #{tpu_custom_call.1} parent=11 // pred_region
          _
        $region16: #{tpu_custom_call.1} parent=11 // pred_fallthru
          _
        // Predicated region
        $region17: #{tpu_custom_call.1} parent=11 // pred_check
          %p191 = pneg %p84
        $region18: #{tpu_custom_call.1} parent=11 // pred_check_branch
          %193 = sbr.rel (%p191) target = $region20
        $region19: #{tpu_custom_call.1} parent=11 // pred_region
          _
        $region20: #{tpu_custom_call.1} parent=11 // pred_fallthru
          _
        // Predicated region
        $region21: #{tpu_custom_call.1} parent=11 // pred_check
          %p194 = pneg %p105
        $region22: #{tpu_custom_call.1} parent=11 // pred_check_branch
          %196 = sbr.rel (%p194) target = $region24
        $region23: #{tpu_custom_call.1} parent=11 // pred_region
          _
        $region24: #{tpu_custom_call.1} parent=11 // pred_fallthru
          _
        // Predicated region
        $region25: #{tpu_custom_call.1} parent=11 // pred_check
          %p197 = pneg %p126
        $region26: #{tpu_custom_call.1} parent=11 // pred_check_branch
          %199 = sbr.rel (%p197) target = $region28
        $region27: #{tpu_custom_call.1} parent=11 // pred_region
          _
        $region28: #{tpu_custom_call.1} parent=11 // pred_fallthru
          _
        // Predicated region
        $region29: #{tpu_custom_call.1} parent=11 // pred_check
          %p200 = pneg %p147
        $region30: #{tpu_custom_call.1} parent=11 // pred_check_branch
          %202 = sbr.rel (%p200) target = $region32
        $region31: #{tpu_custom_call.1} parent=11 // pred_region
          %s204 = ssub.s32 1024, 1024
          %205 = vsyncadd [#allocation3], %s204
          %s206 = sshll.u32 [#allocation2], 4
          %s207 = int_to_ptr.vmem [resolvable:$true] %s206
          %212 = dma.hbm_to_vmem [thread:$0]  %s5, 1024, %s207, [#allocation3], 256, 256, 16
        $region32: #{tpu_custom_call.1} parent=11 // pred_fallthru
          _
      $region12: #{tpu_custom_call.1} parent=5 // pred_fallthru
        _
      %p213 = scmp.lt.s32.totalorder %s16, 2
      // Predicated region
      $region33: #{tpu_custom_call.1} parent=5 // pred_check
        %p214 = pneg %p213
      $region34: #{tpu_custom_call.1} parent=5 // pred_check_branch
        %216 = sbr.rel (%p214) target = $region36
      $region35: #{tpu_custom_call.1} parent=5 // pred_region
        // Predicated region
        $region37: #{tpu_custom_call.1} parent=35 // pred_check
          %p217 = pneg %p36
        $region38: #{tpu_custom_call.1} parent=35 // pred_check_branch
          %219 = sbr.rel (%p217) target = $region40
        $region39: #{tpu_custom_call.1} parent=35 // pred_region
          %s220 = smul.u32 4, %s16
          %p221 = scmp.lt.s32.totalorder %s220, 7
          %s222 = scalar_select %p221, %s220, 7
          %s223 = smul.addr %s222, 8
          %s224 = scalar_lea.vmem %s0, %s223
          %s225 = smul.u32 4, %s16
        $region40: #{tpu_custom_call.1} parent=35 // pred_fallthru
          _
      $region36: #{tpu_custom_call.1} parent=5 // pred_fallthru
        _
      %p226 = scmp.le.s32.totalorder 1, %s16
      %p227 = scmp.lt.s32.totalorder %s16, 3
      %p228 = pnand %p226, %p227
      %p229 = pneg %p228
      // Predicated region
      $region41: #{tpu_custom_call.1} parent=5 // pred_check
        _
      $region42: #{tpu_custom_call.1} parent=5 // pred_check_branch
        %231 = sbr.rel (%p228) target = $region44
      $region43: #{tpu_custom_call.1} parent=5 // pred_region
        %s232 = ssub.s32 %s16, 1
        // Predicated region
        $region45: #{tpu_custom_call.1} parent=43 // pred_check
          %p233 = pneg %p147
        $region46: #{tpu_custom_call.1} parent=43 // pred_check_branch
          %235 = sbr.rel (%p233) target = $region48
        $region47: #{tpu_custom_call.1} parent=43 // pred_region
          %236 = dma.done [#allocation3], 1024
        $region48: #{tpu_custom_call.1} parent=43 // pred_fallthru
          _
        %s237 = smul.u32 4, %s21
        %p238 = scmp.lt.s32.totalorder %s237, 7
        %s239 = scalar_select %p238, %s237, 7
        %s240 = smul.addr %s239, 8
        %s241 = scalar_lea.vmem %s0, %s240
        %p242 = pneg %p42
        %p243 = pneg %p39
        %p244 = pneg %p63
        %p245 = pneg %p60
        %p246 = pneg %p84
        %p247 = pneg %p81
        %p248 = pneg %p105
        %p249 = pneg %p102
        %p250 = pneg %p126
        %p251 = pneg %p123
        %p252 = pneg %p147
        %p253 = pneg %p144
        %p254 = pneg %p173
        %p255 = pneg %p170
        %s256 = sand.u32 %s160, 1
        %s257 = scalar_lea.sflag [#allocation4], %s256
        %s258 = sand.u32 %s160, 1
        %s259 = smul.addr %s258, 32
        %s260 = scalar_lea.vmem [#allocation5], %s259
        %s261 = smul.u32 4, %s21
        %p262 = scmp.lt.s32.totalorder %s261, 7
        %s263 = scalar_select %p262, %s261, 7
        %s264 = smul.addr %s263, 8
        %s265 = scalar_lea.vmem %s0, %s264
        %s266 = smul.u32 4, %s21
        %s267 = smul.u32 4, %s21
        %v268 = vld [vmem:[%s265] sm:$0xff]
        %v269 = vld [vmem:[%s265 + $0x8] sm:$0xff]
        %v270 = vld [vmem:[%s265 + $0x10] sm:$0xff]
        %v271 = vld [vmem:[%s265 + $0x18] sm:$0xff]
        %v272 = vld [vmem:[%s1] sm:$0xff]
        %v273 = vld [vmem:[%s1 + $0x8] sm:$0xff]
        %v274 = vld [vmem:[%s1 + $0x10] sm:$0xff]
        %v275 = vld [vmem:[%s1 + $0x18] sm:$0xff]
        %v276 = vld [vmem:[%s1 + $0x20] sm:$0xff]
        %v277 = vld [vmem:[%s1 + $0x28] sm:$0xff]
        %v278 = vld [vmem:[%s1 + $0x30] sm:$0xff]
        %v279 = vld [vmem:[%s1 + $0x38] sm:$0xff]
        %v280 = vld [vmem:[%s1 + $0x40] sm:$0xff]
        %v281 = vld [vmem:[%s1 + $0x48] sm:$0xff]
        %v282 = vld [vmem:[%s1 + $0x50] sm:$0xff]
        %v283 = vld [vmem:[%s1 + $0x58] sm:$0xff]
        %v284 = vld [vmem:[%s1 + $0x60] sm:$0xff]
        %v285 = vld [vmem:[%s1 + $0x68] sm:$0xff]
        %v286 = vld [vmem:[%s1 + $0x70] sm:$0xff]
        %v287 = vld [vmem:[%s1 + $0x78] sm:$0xff]
        %288 = vmatprep.subr.mxu0 0.0
        %289 = vmatpush1.msra.mxu0 %v272
        %290 = vmatprep.subr.mxu0 0.0
        %291 = vmatpush1.msra.mxu0 %v273
        %292 = vmatprep.subr.mxu0 0.0
        %293 = vmatpush1.msra.mxu0 %v274
        %294 = vmatprep.subr.mxu0 0.0
        %295 = vmatpush1.msra.mxu0 %v275
        %296 = vmatprep.subr.mxu0 0.0
        %297 = vmatpush1.msra.mxu0 %v276
        %298 = vmatprep.subr.mxu0 0.0
        %299 = vmatpush1.msra.mxu0 %v277
        %300 = vmatprep.subr.mxu0 0.0
        %301 = vmatpush1.msra.mxu0 %v278
        %302 = vmatprep.subr.mxu0 0.0
        %303 = vmatpush1.msra.mxu0 %v279
        %304 = vmatprep.subr.mxu0 0.0
        %305 = vmatpush1.msra.mxu0 %v280
        %306 = vmatprep.subr.mxu0 0.0
        %307 = vmatpush1.msra.mxu0 %v281
        %308 = vmatprep.subr.mxu0 0.0
        %309 = vmatpush1.msra.mxu0 %v282
        %310 = vmatprep.subr.mxu0 0.0
        %311 = vmatpush1.msra.mxu0 %v283
        %312 = vmatprep.subr.mxu0 0.0
        %313 = vmatpush1.msra.mxu0 %v284
        %314 = vmatprep.subr.mxu0 0.0
        %315 = vmatpush1.msra.mxu0 %v285
        %316 = vmatprep.subr.mxu0 0.0
        %317 = vmatpush1.msra.mxu0 %v286
        %318 = vmatprep.subr.mxu0 0.0
        %319 = vmatpush1.msra.mxu0 %v287
        %320 = vmatprep.subr.mxu0 0.0
        %321 = vmatpush1.msra.mxu0 0.0
        %322 = vmatprep.subr.mxu0 0.0
        %323 = vmatpush1.msra.mxu0 0.0
        %324 = vmatprep.subr.mxu0 0.0
        %325 = vmatpush1.msra.mxu0 0.0
        %326 = vmatprep.subr.mxu0 0.0
        %327 = vmatpush1.msra.mxu0 0.0
        %328 = vmatprep.subr.mxu0 0.0
        %329 = vmatpush1.msra.mxu0 0.0
        %330 = vmatprep.subr.mxu0 0.0
        %331 = vmatpush1.msra.mxu0 0.0
        %332 = vmatprep.subr.mxu0 0.0
        %333 = vmatpush1.msra.mxu0 0.0
        %334 = vmatprep.subr.mxu0 0.0
        %335 = vmatpush1.msra.mxu0 0.0
        %336 = vmatprep.subr.mxu0 0.0
        %337 = vmatpush1.msra.mxu0 0.0
        %338 = vmatprep.subr.mxu0 0.0
        %339 = vmatpush1.msra.mxu0 0.0
        %340 = vmatprep.subr.mxu0 0.0
        %341 = vmatpush1.msra.mxu0 0.0
        %342 = vmatprep.subr.mxu0 0.0
        %343 = vmatpush1.msra.mxu0 0.0
        %344 = vmatprep.subr.mxu0 0.0
        %345 = vmatpush1.msra.mxu0 0.0
        %346 = vmatprep.subr.mxu0 0.0
        %347 = vmatpush1.msra.mxu0 0.0
        %348 = vmatprep.subr.mxu0 0.0
        %349 = vmatpush1.msra.mxu0 0.0
        %350 = vmatprep.subr.mxu0 0.0
        %351 = vmatpush1.msra.mxu0 0.0
        %352 = vmatprep.mubr.f32.mxu0 0.0
        %353 = vmatmul.mubr.f32.gmra.mrb[0].mxu0 %v268
        %v354 = vpop.f32.mrb[0].mxu0
        %v355 = vadd.f32 0.0, %v354
        %v356 = vpop.f32.mrb[0].mxu0
        %357 = vmatprep.mubr.f32.mxu0 0.0
        %358 = vmatmul.mubr.f32.gmra.mrb[0].mxu0 %v269
        %v359 = vpop.f32.mrb[0].mxu0
        %v360 = vadd.f32 0.0, %v359
        %v361 = vpop.f32.mrb[0].mxu0
        %362 = vmatprep.mubr.f32.mxu0 0.0
        %363 = vmatmul.mubr.f32.gmra.mrb[0].mxu0 %v270
        %v364 = vpop.f32.mrb[0].mxu0
        %v365 = vadd.f32 0.0, %v364
        %v366 = vpop.f32.mrb[0].mxu0
        %367 = vmatprep.mubr.f32.mxu0 0.0
        %368 = vmatmul.mubr.f32.gmra.mrb[0].mxu0 %v271
        %v369 = vpop.f32.mrb[0].mxu0
        %v370 = vadd.f32 0.0, %v369
        %v371 = vpop.f32.mrb[0].mxu0
        %372 = vdwg.mxu0
        %v373 = vlaneseq
        %v374 = vshrl.u32 %v373, 7
        %v375 = vadd.s32 %v374, 8
        %v376 = vadd.s32 %v374, 16
        %v377 = vadd.s32 %v374, 24
        %vm378 = vcmp.lt.s32.totalorder %v374, 0
        %v379 = vsub.s32 0, %v374
        %v380 = vsel %vm378, %v379, %v374
        %v381 = vshrl.u32 %v380, 3
        %v382 = vand.u32 %v380, 7
        %v383 = vsub.s32 0, %v382
        %v384 = vsel %vm378, %v383, %v382
        %vm385 = vcmp.lt.s32.totalorder %v375, 0
        %v386 = vsub.s32 0, %v375
        %v387 = vsel %vm385, %v386, %v375
        %v388 = vshrl.u32 %v387, 3
        %v389 = vand.u32 %v387, 7
        %v390 = vsub.s32 0, %v389
        %v391 = vsel %vm385, %v390, %v389
        %vm392 = vcmp.lt.s32.totalorder %v376, 0
        %v393 = vsub.s32 0, %v376
        %v394 = vsel %vm392, %v393, %v376
        %v395 = vshrl.u32 %v394, 3
        %v396 = vand.u32 %v394, 7
        %v397 = vsub.s32 0, %v396
        %v398 = vsel %vm392, %v397, %v396
        %vm399 = vcmp.lt.s32.totalorder %v377, 0
        %v400 = vsub.s32 0, %v377
        %v401 = vsel %vm399, %v400, %v377
        %v402 = vshrl.u32 %v401, 3
        %v403 = vand.u32 %v401, 7
        %v404 = vsub.s32 0, %v403
        %v405 = vsel %vm399, %v404, %v403
        %vm406 = vcmp.ne.s32.totalorder %v384, 0
        %vm407 = vcmp.ne.s32.totalorder %v391, 0
        %vm408 = vcmp.ne.s32.totalorder %v398, 0
        %vm409 = vcmp.ne.s32.totalorder %v405, 0
        %vm410 = vcmp.lt.s32.totalorder %v384, 0
        %vm411 = vcmp.lt.s32.totalorder %v391, 0
        %vm412 = vcmp.lt.s32.totalorder %v398, 0
        %vm413 = vcmp.lt.s32.totalorder %v405, 0
        %vm414 = vmand %vm410, %vm406
        %vm415 = vmand %vm411, %vm407
        %vm416 = vmand %vm412, %vm408
        %vm417 = vmand %vm413, %vm409
        %v418 = vadd.s32 %v384, 8
        %v419 = vadd.s32 %v391, 8
        %v420 = vadd.s32 %v398, 8
        %v421 = vadd.s32 %v405, 8
        %v422 = vsel %vm414, %v418, %v384
        %v423 = vsel %vm415, %v419, %v391
        %v424 = vsel %vm416, %v420, %v398
        %v425 = vsel %vm417, %v421, %v405
        %vm426 = vcmp.gt.s32.totalorder %v422, 0
        %vm427 = vcmp.gt.s32.totalorder %v423, 0
        %vm428 = vcmp.gt.s32.totalorder %v424, 0
        %vm429 = vcmp.gt.s32.totalorder %v425, 0
        %v430 = vrot.slane %v355, 7
        %v431 = vrot.slane %v360, 7
        %v432 = vrot.slane %v365, 7
        %v433 = vrot.slane %v370, 7
        %vm434 = vcmp.lt.s32.totalorder %v374, 1
        %v435 = vsel %vm434, %v432, %v433
        %v436 = vsel %vm434, %v431, %v432
        %v437 = vsel %vm434, %v430, %v431
        %v438 = vsel %vm434, %v433, %v430
        %v439 = vsel %vm426, 1, 0
        %v440 = vsel %vm427, 1, 0
        %v441 = vsel %vm428, 1, 0
        %v442 = vsel %vm429, 1, 0
        %vm443 = vcmp.eq.s32.totalorder %v439, 1
        %vm444 = vcmp.eq.s32.totalorder %v440, 1
        %vm445 = vcmp.eq.s32.totalorder %v441, 1
        %vm446 = vcmp.eq.s32.totalorder %v442, 1
        %v447 = vsel %vm443, %v438, 0.0
        %v448 = vsel %vm444, %v437, 0.0
        %v449 = vsel %vm445, %v436, 0.0
        %v450 = vsel %vm446, %v435, 0.0
        %vm451 = vcmp.lt.s32.totalorder %v422, 7
        %vm452 = vcmp.lt.s32.totalorder %v423, 7
        %vm453 = vcmp.lt.s32.totalorder %v424, 7
        %vm454 = vcmp.lt.s32.totalorder %v425, 7
        %v455 = vrot.slane %v355, 1
        %v456 = vrot.slane %v360, 1
        %v457 = vrot.slane %v365, 1
        %v458 = vrot.slane %v370, 1
        %vm459 = vcmp.lt.s32.totalorder %v374, 7
        %v460 = vsel %vm459, %v457, %v458
        %v461 = vsel %vm459, %v456, %v457
        %v462 = vsel %vm459, %v455, %v456
        %v463 = vsel %vm459, %v458, %v455
        %v464 = vsel %vm451, 1, 0
        %v465 = vsel %vm452, 1, 0
        %v466 = vsel %vm453, 1, 0
        %v467 = vsel %vm454, 1, 0
        %vm468 = vcmp.eq.s32.totalorder %v464, 1
        %vm469 = vcmp.eq.s32.totalorder %v465, 1
        %vm470 = vcmp.eq.s32.totalorder %v466, 1
        %vm471 = vcmp.eq.s32.totalorder %v467, 1
        %v472 = vsel %vm468, %v462, 0.0
        %v473 = vsel %vm469, %v461, 0.0
        %v474 = vsel %vm470, %v460, 0.0
        %v475 = vsel %vm471, %v463, 0.0
        %v476 = vld [vmem:[%s3] sm:$0x3]
        %v477 = vld [vmem:[%s2] sm:$0xff]
        %v478 = vld [vmem:[%s2 + $0x8] sm:$0xff]
        %v479 = vld [vmem:[%s2 + $0x10] sm:$0xff]
        %v480 = vld [vmem:[%s2 + $0x18] sm:$0xff]
        %v481 = vld [vmem:[%s2 + $0x20] sm:$0xff]
        %v482 = vld [vmem:[%s2 + $0x28] sm:$0xff]
        %v483 = vld [vmem:[%s2 + $0x30] sm:$0xff]
        %v484 = vld [vmem:[%s2 + $0x38] sm:$0xff]
        %v485 = vld [vmem:[%s2 + $0x40] sm:$0xff]
        %v486 = vld [vmem:[%s2 + $0x48] sm:$0xff]
        %v487 = vld [vmem:[%s2 + $0x50] sm:$0xff]
        %v488 = vld [vmem:[%s2 + $0x58] sm:$0xff]
        %v489 = vld [vmem:[%s2 + $0x60] sm:$0xff]
        %v490 = vld [vmem:[%s2 + $0x68] sm:$0xff]
        %v491 = vld [vmem:[%s2 + $0x70] sm:$0xff]
        %v492 = vld [vmem:[%s2 + $0x78] sm:$0xff]
        %vm493 = vcmask 523264
        %v495 = vsel %vm493, %v447, 0
        %v498 = vsel %vm493, %v448, 0
        %v501 = vsel %vm493, %v449, 0
        %v504 = vsel %vm493, %v450, 0
        %506 = vmatprep.subr.mxu0 %v478
        %507 = vmatpush1.msra.mxu0 %v477
        %508 = vmatprep.subr.mxu0 %v480
        %509 = vmatpush1.msra.mxu0 %v479
        %510 = vmatprep.subr.mxu0 %v482
        %511 = vmatpush1.msra.mxu0 %v481
        %512 = vmatprep.subr.mxu0 %v484
        %513 = vmatpush1.msra.mxu0 %v483
        %514 = vmatprep.subr.mxu0 %v486
        %515 = vmatpush1.msra.mxu0 %v485
        %516 = vmatprep.subr.mxu0 %v488
        %517 = vmatpush1.msra.mxu0 %v487
        %518 = vmatprep.subr.mxu0 %v490
        %519 = vmatpush1.msra.mxu0 %v489
        %520 = vmatprep.subr.mxu0 %v492
        %521 = vmatpush1.msra.mxu0 %v491
        %522 = vmatprep.subr.mxu0 0.0
        %523 = vmatpush1.msra.mxu0 0.0
        %524 = vmatprep.subr.mxu0 0.0
        %525 = vmatpush1.msra.mxu0 0.0
        %526 = vmatprep.subr.mxu0 0.0
        %527 = vmatpush1.msra.mxu0 0.0
        %528 = vmatprep.subr.mxu0 0.0
        %529 = vmatpush1.msra.mxu0 0.0
        %530 = vmatprep.subr.mxu0 0.0
        %531 = vmatpush1.msra.mxu0 0.0
        %532 = vmatprep.subr.mxu0 0.0
        %533 = vmatpush1.msra.mxu0 0.0
        %534 = vmatprep.subr.mxu0 0.0
        %535 = vmatpush1.msra.mxu0 0.0
        %536 = vmatprep.subr.mxu0 0.0
        %537 = vmatpush1.msra.mxu0 0.0
        %538 = vmatprep.subr.mxu0 0.0
        %539 = vmatpush1.msra.mxu0 0.0
        %540 = vmatprep.subr.mxu0 0.0
        %541 = vmatpush1.msra.mxu0 0.0
        %542 = vmatprep.subr.mxu0 0.0
        %543 = vmatpush1.msra.mxu0 0.0
        %544 = vmatprep.subr.mxu0 0.0
        %545 = vmatpush1.msra.mxu0 0.0
        %546 = vmatprep.subr.mxu0 0.0
        %547 = vmatpush1.msra.mxu0 0.0
        %548 = vmatprep.subr.mxu0 0.0
        %549 = vmatpush1.msra.mxu0 0.0
        %550 = vmatprep.subr.mxu0 0.0
        %551 = vmatpush1.msra.mxu0 0.0
        %552 = vmatprep.subr.mxu0 0.0
        %553 = vmatpush1.msra.mxu0 0.0
        %554 = vmatprep.subr.mxu0 0.0
        %555 = vmatpush1.msra.mxu0 0.0
        %556 = vmatprep.subr.mxu0 0.0
        %557 = vmatpush1.msra.mxu0 0.0
        %558 = vmatprep.subr.mxu0 0.0
        %559 = vmatpush1.msra.mxu0 0.0
        %560 = vmatprep.subr.mxu0 0.0
        %561 = vmatpush1.msra.mxu0 0.0
        %562 = vmatprep.subr.mxu0 0.0
        %563 = vmatpush1.msra.mxu0 0.0
        %564 = vmatprep.subr.mxu0 0.0
        %565 = vmatpush1.msra.mxu0 0.0
        %566 = vmatprep.subr.mxu0 0.0
        %567 = vmatpush1.msra.mxu0 0.0
        %568 = vmatprep.subr.mxu0 0.0
        %569 = vmatpush1.msra.mxu0 0.0
        %570 = vmatprep.mubr.f32.mxu0 0.0
        %571 = vmatmul.mubr.f32.gmra.mrb[0].mxu0 %v495
        %v572 = vpop.f32.mrb[0].mxu0
        %v573 = vadd.f32 0.0, %v572
        %v574 = vpop.f32.mrb[0].mxu0
        %v575 = vadd.f32 0.0, %v574
        %576 = vmatprep.mubr.f32.mxu0 0.0
        %577 = vmatmul.mubr.f32.gmra.mrb[0].mxu0 %v498
        %v578 = vpop.f32.mrb[0].mxu0
        %v579 = vadd.f32 0.0, %v578
        %v580 = vpop.f32.mrb[0].mxu0
        %v581 = vadd.f32 0.0, %v580
        %582 = vmatprep.mubr.f32.mxu0 0.0
        %583 = vmatmul.mubr.f32.gmra.mrb[0].mxu0 %v501
        %v584 = vpop.f32.mrb[0].mxu0
        %v585 = vadd.f32 0.0, %v584
        %v586 = vpop.f32.mrb[0].mxu0
        %v587 = vadd.f32 0.0, %v586
        %588 = vmatprep.mubr.f32.mxu0 0.0
        %589 = vmatmul.mubr.f32.gmra.mrb[0].mxu0 %v504
        %v590 = vpop.f32.mrb[0].mxu0
        %v591 = vadd.f32 0.0, %v590
        %v592 = vpop.f32.mrb[0].mxu0
        %v593 = vadd.f32 0.0, %v592
        %594 = vdwg.mxu0
        %v596 = vlaneseq
        %v597 = vshrl.u32 %v596, 7
        %v598 = vsub.s32 0, %v597
        %v599 = vrot.slane %v476, %v598
        %v600 = vlaneseq
        %v601 = vshrl.u32 %v600, 7
        %v602 = vsub.s32 1, %v601
        %v603 = vrot.slane %v476, %v602
        %v606 = vadd.f32 %v599, %v573
        %v607 = vadd.f32 %v603, %v575
        %v608 = vadd.f32 %v599, %v579
        %v609 = vadd.f32 %v603, %v581
        %v610 = vadd.f32 %v599, %v585
        %v611 = vadd.f32 %v603, %v587
        %v612 = vadd.f32 %v599, %v591
        %v613 = vadd.f32 %v603, %v593
        %s614 = scalar_lea.vmem %s2, 128
        %v615 = vld [vmem:[%s614] sm:$0xff]
        %v616 = vld [vmem:[%s614 + $0x8] sm:$0xff]
        %v617 = vld [vmem:[%s614 + $0x10] sm:$0xff]
        %v618 = vld [vmem:[%s614 + $0x18] sm:$0xff]
        %v619 = vld [vmem:[%s614 + $0x20] sm:$0xff]
        %v620 = vld [vmem:[%s614 + $0x28] sm:$0xff]
        %v621 = vld [vmem:[%s614 + $0x30] sm:$0xff]
        %v622 = vld [vmem:[%s614 + $0x38] sm:$0xff]
        %v623 = vld [vmem:[%s614 + $0x40] sm:$0xff]
        %v624 = vld [vmem:[%s614 + $0x48] sm:$0xff]
        %v625 = vld [vmem:[%s614 + $0x50] sm:$0xff]
        %v626 = vld [vmem:[%s614 + $0x58] sm:$0xff]
        %v627 = vld [vmem:[%s614 + $0x60] sm:$0xff]
        %v628 = vld [vmem:[%s614 + $0x68] sm:$0xff]
        %v629 = vld [vmem:[%s614 + $0x70] sm:$0xff]
        %v630 = vld [vmem:[%s614 + $0x78] sm:$0xff]
        %v632 = vsel %vm493, %v355, 0
        %v635 = vsel %vm493, %v360, 0
        %v638 = vsel %vm493, %v365, 0
        %v641 = vsel %vm493, %v370, 0
        %643 = vmatprep.subr.mxu0 %v616
        %644 = vmatpush1.msra.mxu0 %v615
        %645 = vmatprep.subr.mxu0 %v618
        %646 = vmatpush1.msra.mxu0 %v617
        %647 = vmatprep.subr.mxu0 %v620
        %648 = vmatpush1.msra.mxu0 %v619
        %649 = vmatprep.subr.mxu0 %v622
        %650 = vmatpush1.msra.mxu0 %v621
        %651 = vmatprep.subr.mxu0 %v624
        %652 = vmatpush1.msra.mxu0 %v623
        %653 = vmatprep.subr.mxu0 %v626
        %654 = vmatpush1.msra.mxu0 %v625
        %655 = vmatprep.subr.mxu0 %v628
        %656 = vmatpush1.msra.mxu0 %v627
        %657 = vmatprep.subr.mxu0 %v630
        %658 = vmatpush1.msra.mxu0 %v629
        %659 = vmatprep.subr.mxu0 0.0
        %660 = vmatpush1.msra.mxu0 0.0
        %661 = vmatprep.subr.mxu0 0.0
        %662 = vmatpush1.msra.mxu0 0.0
        %663 = vmatprep.subr.mxu0 0.0
        %664 = vmatpush1.msra.mxu0 0.0
        %665 = vmatprep.subr.mxu0 0.0
        %666 = vmatpush1.msra.mxu0 0.0
        %667 = vmatprep.subr.mxu0 0.0
        %668 = vmatpush1.msra.mxu0 0.0
        %669 = vmatprep.subr.mxu0 0.0
        %670 = vmatpush1.msra.mxu0 0.0
        %671 = vmatprep.subr.mxu0 0.0
        %672 = vmatpush1.msra.mxu0 0.0
        %673 = vmatprep.subr.mxu0 0.0
        %674 = vmatpush1.msra.mxu0 0.0
        %675 = vmatprep.subr.mxu0 0.0
        %676 = vmatpush1.msra.mxu0 0.0
        %677 = vmatprep.subr.mxu0 0.0
        %678 = vmatpush1.msra.mxu0 0.0
        %679 = vmatprep.subr.mxu0 0.0
        %680 = vmatpush1.msra.mxu0 0.0
        %681 = vmatprep.subr.mxu0 0.0
        %682 = vmatpush1.msra.mxu0 0.0
        %683 = vmatprep.subr.mxu0 0.0
        %684 = vmatpush1.msra.mxu0 0.0
        %685 = vmatprep.subr.mxu0 0.0
        %686 = vmatpush1.msra.mxu0 0.0
        %687 = vmatprep.subr.mxu0 0.0
        %688 = vmatpush1.msra.mxu0 0.0
        %689 = vmatprep.subr.mxu0 0.0
        %690 = vmatpush1.msra.mxu0 0.0
        %691 = vmatprep.subr.mxu0 0.0
        %692 = vmatpush1.msra.mxu0 0.0
        %693 = vmatprep.subr.mxu0 0.0
        %694 = vmatpush1.msra.mxu0 0.0
        %695 = vmatprep.subr.mxu0 0.0
        %696 = vmatpush1.msra.mxu0 0.0
        %697 = vmatprep.subr.mxu0 0.0
        %698 = vmatpush1.msra.mxu0 0.0
        %699 = vmatprep.subr.mxu0 0.0
        %700 = vmatpush1.msra.mxu0 0.0
        %701 = vmatprep.subr.mxu0 0.0
        %702 = vmatpush1.msra.mxu0 0.0
        %703 = vmatprep.subr.mxu0 0.0
        %704 = vmatpush1.msra.mxu0 0.0
        %705 = vmatprep.subr.mxu0 0.0
        %706 = vmatpush1.msra.mxu0 0.0
        %707 = vmatprep.mubr.f32.mxu0 0.0
        %708 = vmatmul.mubr.f32.gmra.mrb[0].mxu0 %v632
        %v709 = vpop.f32.mrb[0].mxu0
        %v710 = vadd.f32 0.0, %v709
        %v711 = vpop.f32.mrb[0].mxu0
        %v712 = vadd.f32 0.0, %v711
        %713 = vmatprep.mubr.f32.mxu0 0.0
        %714 = vmatmul.mubr.f32.gmra.mrb[0].mxu0 %v635
        %v715 = vpop.f32.mrb[0].mxu0
        %v716 = vadd.f32 0.0, %v715
        %v717 = vpop.f32.mrb[0].mxu0
        %v718 = vadd.f32 0.0, %v717
        %719 = vmatprep.mubr.f32.mxu0 0.0
        %720 = vmatmul.mubr.f32.gmra.mrb[0].mxu0 %v638
        %v721 = vpop.f32.mrb[0].mxu0
        %v722 = vadd.f32 0.0, %v721
        %v723 = vpop.f32.mrb[0].mxu0
        %v724 = vadd.f32 0.0, %v723
        %725 = vmatprep.mubr.f32.mxu0 0.0
        %726 = vmatmul.mubr.f32.gmra.mrb[0].mxu0 %v641
        %v727 = vpop.f32.mrb[0].mxu0
        %v728 = vadd.f32 0.0, %v727
        %v729 = vpop.f32.mrb[0].mxu0
        %v730 = vadd.f32 0.0, %v729
        %731 = vdwg.mxu0
        %v732 = vadd.f32 %v606, %v710
        %v733 = vadd.f32 %v607, %v712
        %v734 = vadd.f32 %v608, %v716
        %v735 = vadd.f32 %v609, %v718
        %v736 = vadd.f32 %v610, %v722
        %v737 = vadd.f32 %v611, %v724
        %v738 = vadd.f32 %v612, %v728
        %v739 = vadd.f32 %v613, %v730
        %s740 = scalar_lea.vmem %s2, 256
        %v741 = vld [vmem:[%s740] sm:$0xff]
        %v742 = vld [vmem:[%s740 + $0x8] sm:$0xff]
        %v743 = vld [vmem:[%s740 + $0x10] sm:$0xff]
        %v744 = vld [vmem:[%s740 + $0x18] sm:$0xff]
        %v745 = vld [vmem:[%s740 + $0x20] sm:$0xff]
        %v746 = vld [vmem:[%s740 + $0x28] sm:$0xff]
        %v747 = vld [vmem:[%s740 + $0x30] sm:$0xff]
        %v748 = vld [vmem:[%s740 + $0x38] sm:$0xff]
        %v749 = vld [vmem:[%s740 + $0x40] sm:$0xff]
        %v750 = vld [vmem:[%s740 + $0x48] sm:$0xff]
        %v751 = vld [vmem:[%s740 + $0x50] sm:$0xff]
        %v752 = vld [vmem:[%s740 + $0x58] sm:$0xff]
        %v753 = vld [vmem:[%s740 + $0x60] sm:$0xff]
        %v754 = vld [vmem:[%s740 + $0x68] sm:$0xff]
        %v755 = vld [vmem:[%s740 + $0x70] sm:$0xff]
        %v756 = vld [vmem:[%s740 + $0x78] sm:$0xff]
        %v758 = vsel %vm493, %v472, 0
        %v761 = vsel %vm493, %v473, 0
        %v764 = vsel %vm493, %v474, 0
        %v767 = vsel %vm493, %v475, 0
        %769 = vmatprep.subr.mxu0 %v742
        %770 = vmatpush1.msra.mxu0 %v741
        %771 = vmatprep.subr.mxu0 %v744
        %772 = vmatpush1.msra.mxu0 %v743
        %773 = vmatprep.subr.mxu0 %v746
        %774 = vmatpush1.msra.mxu0 %v745
        %775 = vmatprep.subr.mxu0 %v748
        %776 = vmatpush1.msra.mxu0 %v747
        %777 = vmatprep.subr.mxu0 %v750
        %778 = vmatpush1.msra.mxu0 %v749
        %779 = vmatprep.subr.mxu0 %v752
        %780 = vmatpush1.msra.mxu0 %v751
        %781 = vmatprep.subr.mxu0 %v754
        %782 = vmatpush1.msra.mxu0 %v753
        %783 = vmatprep.subr.mxu0 %v756
        %784 = vmatpush1.msra.mxu0 %v755
        %785 = vmatprep.subr.mxu0 0.0
        %786 = vmatpush1.msra.mxu0 0.0
        %787 = vmatprep.subr.mxu0 0.0
        %788 = vmatpush1.msra.mxu0 0.0
        %789 = vmatprep.subr.mxu0 0.0
        %790 = vmatpush1.msra.mxu0 0.0
        %791 = vmatprep.subr.mxu0 0.0
        %792 = vmatpush1.msra.mxu0 0.0
        %793 = vmatprep.subr.mxu0 0.0
        %794 = vmatpush1.msra.mxu0 0.0
        %795 = vmatprep.subr.mxu0 0.0
        %796 = vmatpush1.msra.mxu0 0.0
        %797 = vmatprep.subr.mxu0 0.0
        %798 = vmatpush1.msra.mxu0 0.0
        %799 = vmatprep.subr.mxu0 0.0
        %800 = vmatpush1.msra.mxu0 0.0
        %801 = vmatprep.subr.mxu0 0.0
        %802 = vmatpush1.msra.mxu0 0.0
        %803 = vmatprep.subr.mxu0 0.0
        %804 = vmatpush1.msra.mxu0 0.0
        %805 = vmatprep.subr.mxu0 0.0
        %806 = vmatpush1.msra.mxu0 0.0
        %807 = vmatprep.subr.mxu0 0.0
        %808 = vmatpush1.msra.mxu0 0.0
        %809 = vmatprep.subr.mxu0 0.0
        %810 = vmatpush1.msra.mxu0 0.0
        %811 = vmatprep.subr.mxu0 0.0
        %812 = vmatpush1.msra.mxu0 0.0
        %813 = vmatprep.subr.mxu0 0.0
        %814 = vmatpush1.msra.mxu0 0.0
        %815 = vmatprep.subr.mxu0 0.0
        %816 = vmatpush1.msra.mxu0 0.0
        %817 = vmatprep.subr.mxu0 0.0
        %818 = vmatpush1.msra.mxu0 0.0
        %819 = vmatprep.subr.mxu0 0.0
        %820 = vmatpush1.msra.mxu0 0.0
        %821 = vmatprep.subr.mxu0 0.0
        %822 = vmatpush1.msra.mxu0 0.0
        %823 = vmatprep.subr.mxu0 0.0
        %824 = vmatpush1.msra.mxu0 0.0
        %825 = vmatprep.subr.mxu0 0.0
        %826 = vmatpush1.msra.mxu0 0.0
        %827 = vmatprep.subr.mxu0 0.0
        %828 = vmatpush1.msra.mxu0 0.0
        %829 = vmatprep.subr.mxu0 0.0
        %830 = vmatpush1.msra.mxu0 0.0
        %831 = vmatprep.subr.mxu0 0.0
        %832 = vmatpush1.msra.mxu0 0.0
        %833 = vmatprep.mubr.f32.mxu0 0.0
        %834 = vmatmul.mubr.f32.gmra.mrb[0].mxu0 %v758
        %v835 = vpop.f32.mrb[0].mxu0
        %v836 = vadd.f32 0.0, %v835
        %v837 = vpop.f32.mrb[0].mxu0
        %v838 = vadd.f32 0.0, %v837
        %839 = vmatprep.mubr.f32.mxu0 0.0
        %840 = vmatmul.mubr.f32.gmra.mrb[0].mxu0 %v761
        %v841 = vpop.f32.mrb[0].mxu0
        %v842 = vadd.f32 0.0, %v841
        %v843 = vpop.f32.mrb[0].mxu0
        %v844 = vadd.f32 0.0, %v843
        %845 = vmatprep.mubr.f32.mxu0 0.0
        %846 = vmatmul.mubr.f32.gmra.mrb[0].mxu0 %v764
        %v847 = vpop.f32.mrb[0].mxu0
        %v848 = vadd.f32 0.0, %v847
        %v849 = vpop.f32.mrb[0].mxu0
        %v850 = vadd.f32 0.0, %v849
        %851 = vmatprep.mubr.f32.mxu0 0.0
        %852 = vmatmul.mubr.f32.gmra.mrb[0].mxu0 %v767
        %v853 = vpop.f32.mrb[0].mxu0
        %v854 = vadd.f32 0.0, %v853
        %v855 = vpop.f32.mrb[0].mxu0
        %v856 = vadd.f32 0.0, %v855
        %857 = vdwg.mxu0
        %v858 = vadd.f32 %v732, %v836
        %v859 = vadd.f32 %v733, %v838
        %v860 = vadd.f32 %v734, %v842
        %v861 = vadd.f32 %v735, %v844
        %v862 = vadd.f32 %v736, %v848
        %v863 = vadd.f32 %v737, %v850
        %v864 = vadd.f32 %v738, %v854
        %v865 = vadd.f32 %v739, %v856
        %v866 = vrot.slane %v858, 4
        %v867 = vadd.f32 %v858, %v866
        %v868 = vrot.slane %v867, 2
        %v869 = vadd.f32 %v867, %v868
        %v870 = vrot.slane %v869, 1
        %v871 = vadd.f32 %v869, %v870
        %v872 = vrot.slane %v859, 4
        %v873 = vadd.f32 %v859, %v872
        %v874 = vrot.slane %v873, 2
        %v875 = vadd.f32 %v873, %v874
        %v876 = vrot.slane %v875, 1
        %v877 = vadd.f32 %v875, %v876
        %v878 = vrot.slane %v860, 4
        %v879 = vadd.f32 %v860, %v878
        %v880 = vrot.slane %v879, 2
        %v881 = vadd.f32 %v879, %v880
        %v882 = vrot.slane %v881, 1
        %v883 = vadd.f32 %v881, %v882
        %v884 = vrot.slane %v861, 4
        %v885 = vadd.f32 %v861, %v884
        %v886 = vrot.slane %v885, 2
        %v887 = vadd.f32 %v885, %v886
        %v888 = vrot.slane %v887, 1
        %v889 = vadd.f32 %v887, %v888
        %v890 = vrot.slane %v862, 4
        %v891 = vadd.f32 %v862, %v890
        %v892 = vrot.slane %v891, 2
        %v893 = vadd.f32 %v891, %v892
        %v894 = vrot.slane %v893, 1
        %v895 = vadd.f32 %v893, %v894
        %v896 = vrot.slane %v863, 4
        %v897 = vadd.f32 %v863, %v896
        %v898 = vrot.slane %v897, 2
        %v899 = vadd.f32 %v897, %v898
        %v900 = vrot.slane %v899, 1
        %v901 = vadd.f32 %v899, %v900
        %v902 = vrot.slane %v864, 4
        %v903 = vadd.f32 %v864, %v902
        %v904 = vrot.slane %v903, 2
        %v905 = vadd.f32 %v903, %v904
        %v906 = vrot.slane %v905, 1
        %v907 = vadd.f32 %v905, %v906
        %v908 = vrot.slane %v865, 4
        %v909 = vadd.f32 %v865, %v908
        %v910 = vrot.slane %v909, 2
        %v911 = vadd.f32 %v909, %v910
        %v912 = vrot.slane %v911, 1
        %v913 = vadd.f32 %v911, %v912
        %v914 = vrcp.pop 8.0
        %v915 = vmul.f32 %v871, %v914
        %v916 = vmul.f32 %v877, %v914
        %v917 = vmul.f32 %v883, %v914
        %v918 = vmul.f32 %v889, %v914
        %v919 = vmul.f32 %v895, %v914
        %v920 = vmul.f32 %v901, %v914
        %v921 = vmul.f32 %v907, %v914
        %v922 = vmul.f32 %v913, %v914
        %v923 = vld [vmem:[%s4] sm:$0xff]
        %v924 = vld [vmem:[%s4 + $0x8] sm:$0xff]
        %v925 = vld [vmem:[%s4 + $0x10] sm:$0xff]
        %v926 = vld [vmem:[%s4 + $0x18] sm:$0xff]
        %v927 = vld [vmem:[%s4 + $0x20] sm:$0xff]
        %v928 = vld [vmem:[%s4 + $0x28] sm:$0xff]
        %v929 = vld [vmem:[%s4 + $0x30] sm:$0xff]
        %v930 = vld [vmem:[%s4 + $0x38] sm:$0xff]
        %v931 = vld [vmem:[%s4 + $0x40] sm:$0xff]
        %v932 = vld [vmem:[%s4 + $0x48] sm:$0xff]
        %v933 = vld [vmem:[%s4 + $0x50] sm:$0xff]
        %v934 = vld [vmem:[%s4 + $0x58] sm:$0xff]
        %v935 = vld [vmem:[%s4 + $0x60] sm:$0xff]
        %v936 = vld [vmem:[%s4 + $0x68] sm:$0xff]
        %v937 = vld [vmem:[%s4 + $0x70] sm:$0xff]
        %v938 = vld [vmem:[%s4 + $0x78] sm:$0xff]
        %v939 = vld [vmem:[%s4 + $0x80] sm:$0xff]
        %v940 = vld [vmem:[%s4 + $0x88] sm:$0xff]
        %v941 = vld [vmem:[%s4 + $0x90] sm:$0xff]
        %v942 = vld [vmem:[%s4 + $0x98] sm:$0xff]
        %v943 = vld [vmem:[%s4 + $0xa0] sm:$0xff]
        %v944 = vld [vmem:[%s4 + $0xa8] sm:$0xff]
        %v945 = vld [vmem:[%s4 + $0xb0] sm:$0xff]
        %v946 = vld [vmem:[%s4 + $0xb8] sm:$0xff]
        %v947 = vld [vmem:[%s4 + $0xc0] sm:$0xff]
        %v948 = vld [vmem:[%s4 + $0xc8] sm:$0xff]
        %v949 = vld [vmem:[%s4 + $0xd0] sm:$0xff]
        %v950 = vld [vmem:[%s4 + $0xd8] sm:$0xff]
        %v951 = vld [vmem:[%s4 + $0xe0] sm:$0xff]
        %v952 = vld [vmem:[%s4 + $0xe8] sm:$0xff]
        %v953 = vld [vmem:[%s4 + $0xf0] sm:$0xff]
        %v954 = vld [vmem:[%s4 + $0xf8] sm:$0xff]
        %vm963 = vcmask 1041409
        %v964 = vsel %vm963, %v917, %v915
        %vm965 = vcmask 1042434
        %v966 = vsel %vm965, %v919, %v964
        %vm967 = vcmask 1043459
        %v968 = vsel %vm967, %v921, %v966
        %v969 = vsel %vm963, %v918, %v916
        %v970 = vsel %vm965, %v920, %v969
        %v971 = vsel %vm967, %v922, %v970
        %974 = vmatprep.subr.mxu0 0.0
        %975 = vmatpush1.msra.mxu0 %v923
        %976 = vmatprep.subr.mxu0 0.0
        %977 = vmatpush1.msra.mxu0 %v924
        %978 = vmatprep.subr.mxu0 0.0
        %979 = vmatpush1.msra.mxu0 %v925
        %980 = vmatprep.subr.mxu0 0.0
        %981 = vmatpush1.msra.mxu0 %v926
        %982 = vmatprep.subr.mxu0 0.0
        %983 = vmatpush1.msra.mxu0 %v927
        %984 = vmatprep.subr.mxu0 0.0
        %985 = vmatpush1.msra.mxu0 %v928
        %986 = vmatprep.subr.mxu0 0.0
        %987 = vmatpush1.msra.mxu0 %v929
        %988 = vmatprep.subr.mxu0 0.0
        %989 = vmatpush1.msra.mxu0 %v930
        %990 = vmatprep.subr.mxu0 0.0
        %991 = vmatpush1.msra.mxu0 %v931
        %992 = vmatprep.subr.mxu0 0.0
        %993 = vmatpush1.msra.mxu0 %v932
        %994 = vmatprep.subr.mxu0 0.0
        %995 = vmatpush1.msra.mxu0 %v933
        %996 = vmatprep.subr.mxu0 0.0
        %997 = vmatpush1.msra.mxu0 %v934
        %998 = vmatprep.subr.mxu0 0.0
        %999 = vmatpush1.msra.mxu0 %v935
        %1000 = vmatprep.subr.mxu0 0.0
        %1001 = vmatpush1.msra.mxu0 %v936
        %1002 = vmatprep.subr.mxu0 0.0
        %1003 = vmatpush1.msra.mxu0 %v937
        %1004 = vmatprep.subr.mxu0 0.0
        %1005 = vmatpush1.msra.mxu0 %v938
        %1006 = vmatprep.subr.mxu0 0.0
        %1007 = vmatpush1.msra.mxu0 %v939
        %1008 = vmatprep.subr.mxu0 0.0
        %1009 = vmatpush1.msra.mxu0 %v940
        %1010 = vmatprep.subr.mxu0 0.0
        %1011 = vmatpush1.msra.mxu0 %v941
        %1012 = vmatprep.subr.mxu0 0.0
        %1013 = vmatpush1.msra.mxu0 %v942
        %1014 = vmatprep.subr.mxu0 0.0
        %1015 = vmatpush1.msra.mxu0 %v943
        %1016 = vmatprep.subr.mxu0 0.0
        %1017 = vmatpush1.msra.mxu0 %v944
        %1018 = vmatprep.subr.mxu0 0.0
        %1019 = vmatpush1.msra.mxu0 %v945
        %1020 = vmatprep.subr.mxu0 0.0
        %1021 = vmatpush1.msra.mxu0 %v946
        %1022 = vmatprep.subr.mxu0 0.0
        %1023 = vmatpush1.msra.mxu0 %v947
        %1024 = vmatprep.subr.mxu0 0.0
        %1025 = vmatpush1.msra.mxu0 %v948
        %1026 = vmatprep.subr.mxu0 0.0
        %1027 = vmatpush1.msra.mxu0 %v949
        %1028 = vmatprep.subr.mxu0 0.0
        %1029 = vmatpush1.msra.mxu0 %v950
        %1030 = vmatprep.subr.mxu0 0.0
        %1031 = vmatpush1.msra.mxu0 %v951
        %1032 = vmatprep.subr.mxu0 0.0
        %1033 = vmatpush1.msra.mxu0 %v952
        %1034 = vmatprep.subr.mxu0 0.0
        %1035 = vmatpush1.msra.mxu0 %v953
        %1036 = vmatprep.subr.mxu0 0.0
        %1037 = vmatpush1.msra.mxu0 %v954
        %1038 = vmatprep.mubr.f32.mxu0 %v971
        %1039 = vmatmul.mubr.f32.gmra.mrb[0].mxu0 %v968
        %v1040 = vpop.f32.mrb[0].mxu0
        %v1041 = vadd.f32 0.0, %v1040
        %v1042 = vpop.f32.mrb[0].mxu0
        %1043 = vdwg.mxu0
        %vm1044 = vcmask 257024
        %v1045 = vsel %vm1044, %v1041, -inf
        %1046 = vmax.xlane.f32.xlu0 %v1045
        %v1047 = vpop.xlane.xlu0 %1046
        %v1048 = vsub.f32 %v1041, %v1047
        %v1049 = vmul.f32 %v1048, 1.442695
        %v1050 = vpow.pop %v1049
        %v1051 = vsel %vm1044, %v1050, 0.0
        %1052 = vadd.xlane.f32.xlu0 %v1051
        %v1053 = vpop.xlane.xlu0 %1052
        %v1054 = vrcp.pop %v1053
        %v1055 = vmul.f32 %v1050, %v1054
        %v1056 = vld [vmem:[#allocation2] sm:$0xff]
        %v1057 = vld [vmem:[#allocation2 + $0x8] sm:$0xff]
        %v1058 = vld [vmem:[#allocation2 + $0x10] sm:$0xff]
        %v1059 = vld [vmem:[#allocation2 + $0x18] sm:$0xff]
        %v1060 = vld [vmem:[#allocation2 + $0x20] sm:$0xff]
        %v1061 = vld [vmem:[#allocation2 + $0x28] sm:$0xff]
        %v1062 = vld [vmem:[#allocation2 + $0x30] sm:$0xff]
        %v1063 = vld [vmem:[#allocation2 + $0x38] sm:$0xff]
        %vm1064 = vcmask 261120
        %v1066 = vsel %vm1064, %v1055, 0
        %1068 = vmatprep.subr.mxu0 %v1057
        %1069 = vmatpush1.msra.mxu0 %v1056
        %1070 = vmatprep.subr.mxu0 %v1059
        %1071 = vmatpush1.msra.mxu0 %v1058
        %1072 = vmatprep.subr.mxu0 %v1061
        %1073 = vmatpush1.msra.mxu0 %v1060
        %1074 = vmatprep.subr.mxu0 %v1063
        %1075 = vmatpush1.msra.mxu0 %v1062
        %1076 = vmatprep.subr.mxu0 0.0
        %1077 = vmatpush1.msra.mxu0 0.0
        %1078 = vmatprep.subr.mxu0 0.0
        %1079 = vmatpush1.msra.mxu0 0.0
        %1080 = vmatprep.subr.mxu0 0.0
        %1081 = vmatpush1.msra.mxu0 0.0
        %1082 = vmatprep.subr.mxu0 0.0
        %1083 = vmatpush1.msra.mxu0 0.0
        %1084 = vmatprep.subr.mxu0 0.0
        %1085 = vmatpush1.msra.mxu0 0.0
        %1086 = vmatprep.subr.mxu0 0.0
        %1087 = vmatpush1.msra.mxu0 0.0
        %1088 = vmatprep.subr.mxu0 0.0
        %1089 = vmatpush1.msra.mxu0 0.0
        %1090 = vmatprep.subr.mxu0 0.0
        %1091 = vmatpush1.msra.mxu0 0.0
        %1092 = vmatprep.subr.mxu0 0.0
        %1093 = vmatpush1.msra.mxu0 0.0
        %1094 = vmatprep.subr.mxu0 0.0
        %1095 = vmatpush1.msra.mxu0 0.0
        %1096 = vmatprep.subr.mxu0 0.0
        %1097 = vmatpush1.msra.mxu0 0.0
        %1098 = vmatprep.subr.mxu0 0.0
        %1099 = vmatpush1.msra.mxu0 0.0
        %1100 = vmatprep.subr.mxu0 0.0
        %1101 = vmatpush1.msra.mxu0 0.0
        %1102 = vmatprep.subr.mxu0 0.0
        %1103 = vmatpush1.msra.mxu0 0.0
        %1104 = vmatprep.subr.mxu0 0.0
        %1105 = vmatpush1.msra.mxu0 0.0
        %1106 = vmatprep.subr.mxu0 0.0
        %1107 = vmatpush1.msra.mxu0 0.0
        %1108 = vmatprep.subr.mxu0 0.0
        %1109 = vmatpush1.msra.mxu0 0.0
        %1110 = vmatprep.subr.mxu0 0.0
        %1111 = vmatpush1.msra.mxu0 0.0
        %1112 = vmatprep.subr.mxu0 0.0
        %1113 = vmatpush1.msra.mxu0 0.0
        %1114 = vmatprep.subr.mxu0 0.0
        %1115 = vmatpush1.msra.mxu0 0.0
        %1116 = vmatprep.subr.mxu0 0.0
        %1117 = vmatpush1.msra.mxu0 0.0
        %1118 = vmatprep.subr.mxu0 0.0
        %1119 = vmatpush1.msra.mxu0 0.0
        %1120 = vmatprep.subr.mxu0 0.0
        %1121 = vmatpush1.msra.mxu0 0.0
        %1122 = vmatprep.subr.mxu0 0.0
        %1123 = vmatpush1.msra.mxu0 0.0
        %1124 = vmatprep.subr.mxu0 0.0
        %1125 = vmatpush1.msra.mxu0 0.0
        %1126 = vmatprep.subr.mxu0 0.0
        %1127 = vmatpush1.msra.mxu0 0.0
        %1128 = vmatprep.subr.mxu0 0.0
        %1129 = vmatpush1.msra.mxu0 0.0
        %1130 = vmatprep.subr.mxu0 0.0
        %1131 = vmatpush1.msra.mxu0 0.0
        %1132 = vmatprep.mubr.f32.mxu0 0.0
        %1133 = vmatmul.mubr.f32.gmra.mrb[0].mxu0 %v1066
        %v1134 = vpop.f32.mrb[0].mxu0
        %v1135 = vadd.f32 0.0, %v1134
        %v1136 = vpop.f32.mrb[0].mxu0
        %v1137 = vadd.f32 0.0, %v1136
        %1138 = vdwg.mxu0
        %v1141 = vcombine.low %v1135, %v1137
        %v1143 = vunpack.c.l.s4 1966171168
        %v1144 = vunpack.c.0.s8 %v1143
        %v1145 = vlaneseq
        %v1146 = vshrl.u32 %v1145, 7
        %v1147 = vsub.s32 %v1144, %v1146
        %v1148 = vrot.slane %v1141, %v1147
        %v1149 = vcombine.high %v1148, %v1148
        %v1151 = vunpack.c.l.s4 1966171168
        %v1152 = vunpack.c.0.s8 %v1151
        %v1153 = vlaneseq
        %v1154 = vshrl.u32 %v1153, 7
        %v1155 = vsub.s32 %v1152, %v1154
        %v1156 = vrot.slane %v1148, %v1155
        %v1158 = vunpack.c.l.s4 1966171168
        %v1159 = vunpack.c.0.s8 %v1158
        %v1160 = vlaneseq
        %v1161 = vshrl.u32 %v1160, 7
        %v1162 = vsub.s32 %v1159, %v1161
        %v1163 = vrot.slane %v1149, %v1162
        %v1164 = vcombine.high %v1156, %v1156
        %v1165 = vcombine.high %v1163, %v1163
        %v1166 = vlaneseq
        %v1167 = vshrl.u32 %v1166, 7
        %v1168 = vsub.s32 0, %v1167
        %v1169 = vrot.slane %v1156, %v1168
        %v1170 = vlaneseq
        %v1171 = vshrl.u32 %v1170, 7
        %v1172 = vsub.s32 1, %v1171
        %v1173 = vrot.slane %v1156, %v1172
        %v1174 = vlaneseq
        %v1175 = vshrl.u32 %v1174, 7
        %v1176 = vsub.s32 0, %v1175
        %v1177 = vrot.slane %v1163, %v1176
        %v1178 = vlaneseq
        %v1179 = vshrl.u32 %v1178, 7
        %v1180 = vsub.s32 1, %v1179
        %v1181 = vrot.slane %v1163, %v1180
        %v1182 = vlaneseq
        %v1183 = vshrl.u32 %v1182, 7
        %v1184 = vsub.s32 0, %v1183
        %v1185 = vrot.slane %v1164, %v1184
        %v1186 = vlaneseq
        %v1187 = vshrl.u32 %v1186, 7
        %v1188 = vsub.s32 1, %v1187
        %v1189 = vrot.slane %v1164, %v1188
        %v1190 = vlaneseq
        %v1191 = vshrl.u32 %v1190, 7
        %v1192 = vsub.s32 0, %v1191
        %v1193 = vrot.slane %v1165, %v1192
        %v1194 = vlaneseq
        %v1195 = vshrl.u32 %v1194, 7
        %v1196 = vsub.s32 1, %v1195
        %v1197 = vrot.slane %v1165, %v1196
        %v1206 = vmul.f32 %v858, %v1169
        %v1207 = vmul.f32 %v859, %v1173
        %v1208 = vmul.f32 %v860, %v1177
        %v1209 = vmul.f32 %v861, %v1181
        %v1210 = vmul.f32 %v862, %v1185
        %v1211 = vmul.f32 %v863, %v1189
        %v1212 = vmul.f32 %v864, %v1193
        %v1213 = vmul.f32 %v865, %v1197
        %v1214 = vadd.f32 %v1206, %v1207
        %v1215 = vadd.f32 %v1208, %v1209
        %v1216 = vadd.f32 %v1210, %v1211
        %v1217 = vadd.f32 %v1212, %v1213
        %1218 = vst [vmem:[%s260] sm:$0xff] %v1214
        %1219 = vst [vmem:[%s260 + $0x8] sm:$0xff] %v1215
        %1220 = vst [vmem:[%s260 + $0x10] sm:$0xff] %v1216
        %1221 = vst [vmem:[%s260 + $0x18] sm:$0xff] %v1217
        %s1222 = sand.u32 %s160, 1
        %s1223 = scalar_lea.sflag [#allocation4], %s1222
        %s1224 = sand.u32 %s160, 1
        %s1225 = smul.addr %s1224, 32
        %s1226 = scalar_lea.vmem [#allocation5], %s1225
        // Predicated region
        $region49: #{tpu_custom_call.1} parent=43 // pred_check
          %p1227 = pneg %p170
        $region50: #{tpu_custom_call.1} parent=43 // pred_check_branch
          %1229 = sbr.rel (%p1227) target = $region52
        $region51: #{tpu_custom_call.1} parent=43 // pred_region
          %s1230 = smul.u32 4, %s21
          %s1232 = ssub.s32 512, 512
          %1233 = vsyncadd %s1223, %s1232
          %s1234 = smul.addr %s1230, 128
          %s1235 = scalar_lea.hbm %s6, %s1234
          %s1236 = sshll.u32 %s1226, 4
          %s1237 = int_to_ptr.vmem [resolvable:$true] %s1236
          %1242 = dma.vmem_to_hbm [thread:$0]  %s1237, 512, %s1235, %s1223, 128, 128, 8
        $region52: #{tpu_custom_call.1} parent=43 // pred_fallthru
          _
      $region44: #{tpu_custom_call.1} parent=5 // pred_fallthru
        _
      %p1243 = scmp.le.s32.totalorder 2, %s16
      // Predicated region
      $region53: #{tpu_custom_call.1} parent=5 // pred_check
        %p1244 = pneg %p1243
      $region54: #{tpu_custom_call.1} parent=5 // pred_check_branch
        %1246 = sbr.rel (%p1244) target = $region56
      $region55: #{tpu_custom_call.1} parent=5 // pred_region
        %s1247 = ssub.s32 %s16, 2
        // Predicated region
        $region57: #{tpu_custom_call.1} parent=55 // pred_check
          %p1248 = pneg %p176
        $region58: #{tpu_custom_call.1} parent=55 // pred_check_branch
          %1250 = sbr.rel (%p1248) target = $region60
        $region59: #{tpu_custom_call.1} parent=55 // pred_region
          %s1251 = sand.u32 %s161, 1
          %s1252 = scalar_lea.sflag [#allocation4], %s1251
          %s1253 = sand.u32 %s161, 1
          %s1254 = smul.addr %s1253, 32
          %s1255 = scalar_lea.vmem [#allocation5], %s1254
          %1256 = dma.done %s1252, 512
        $region60: #{tpu_custom_call.1} parent=55 // pred_fallthru
          _
      $region56: #{tpu_custom_call.1} parent=5 // pred_fallthru
        _
    $region6: #{tpu_custom_call.1} parent=1 // loop_footer
      %s20 = sadd.s32 1, %s16
    $region7: #{tpu_custom_call.1} parent=1 // loop_footer_branch
      %15 = sbr.rel target = $region3
    $region8: #{tpu_custom_call.1} parent=1 // loop_exit
      _
    %1257 = vsyncpa [#allocation3], 1
    %s1258 = scalar_lea.sflag [#allocation3], 1
    %1259 = vsyncpa %s1258, 1
    %1260 = vsyncpa [#allocation4], 1
    %s1261 = scalar_lea.sflag [#allocation4], 1
    %1262 = vsyncpa %s1261, 1

</llo_original>
